<compile_context>
chip_gen: v7x
topology: tpu7x:2x2x1
jax: 0.10.0
libtpu: 0.0.40
codegen_flags: <defaults>
</compile_context>

<pallas_src>
import functools

import jax
import jax.numpy as jnp
from jax.experimental import pallas as pl
from jax.experimental.pallas import tpu as pltpu

# ----------------------------- configuration -------------------------------
PATCH = 8                      # patch size for the synthetic image encoder
EMBED = 256                    # embedding dim (matches real SAM mask decoder)
N_POINTS = 6                   # prompt points per image
N_TOKENS = 2 + N_POINTS        # [mask token, iou token, point embeddings]
PATCH_DIM = 3 * PATCH * PATCH  # 192 (no K padding — block dim == full array dim)


def _round_up(x, m):
    return ((x + m - 1) // m) * m


def _pick_vmem_limit():
    """Generation-dependent VMEM cap: ~75% of physical, 100 MiB ceiling."""
    try:
        cap = pltpu.get_tpu_info().vmem_capacity_bytes
        return int(min(cap * 3 // 4, 100 * 1024 * 1024))
    except Exception:
        return 32 * 1024 * 1024  # safe fallback on every generation


VMEM_LIMIT = _pick_vmem_limit()


# ============================ Pallas kernel 1 ===============================
# Patch embedding:  out = patches @ W + b       (the "image encoder" matmul)
def patch_embed_kernel(p_ref, w_ref, b_ref, o_ref):
    acc = jnp.dot(p_ref[...], w_ref[...], preferred_element_type=jnp.float32)
    o_ref[...] = (acc + b_ref[...]).astype(o_ref.dtype)


def patch_embed(patches, w, bias, *, tm=1024):
    """patches: (N, 192) bf16, w: (192, C) bf16, bias: (1, C) f32 -> (N, C) bf16."""
    n, d = patches.shape
    c = w.shape[1]
    tm = min(tm, _round_up(n, 16))
    # Prefer >= 2 grid steps (v7x megacore + pipeline overlap) when possible.
    half = _round_up((n + 1) // 2, 16)
    if n >= 32 and tm > half:
        tm = half
    n_pad = _round_up(n, tm)
    if n_pad != n:
        patches = jnp.pad(patches, ((0, n_pad - n), (0, 0)))
    out = pl.pallas_call(
        patch_embed_kernel,
        out_shape=jax.ShapeDtypeStruct((n_pad, c), jnp.bfloat16),
        grid=(n_pad // tm,),
        in_specs=[
            pl.BlockSpec((tm, d), lambda i: (i, 0)),     # K=192 == full array dim
            pl.BlockSpec((d, c), lambda i: (0, 0)),
            pl.BlockSpec((1, c), lambda i: (0, 0)),
        ],
        out_specs=pl.BlockSpec((tm, c), lambda i: (i, 0)),
        compiler_params=pltpu.CompilerParams(
            dimension_semantics=("parallel",),
            vmem_limit_bytes=VMEM_LIMIT),
    )(patches, w, bias)
    return out[:n]


# ============================ Pallas kernel 2 ===============================
# Fused mask decoder for a block of Bb batch elements:
#   q  = tokens @ Wq
#   kv = img @ [Wk | Wv]   (fused);  k = kv[..:C] + pe@Wk (precomputed, linear!)
#   attn = softmax(q k^T / sqrt(C)) ; tok_out = attn @ v
#   hyper = tok_out[mask_token] @ Wh ; mask = sigmoid(hyper . img)
def mask_decoder_kernel(tok_ref, img_ref, pe_k_ref, wq_ref, wkv_ref, wh_ref,
                        o_ref, *, p_actual):
    bb, t, c = tok_ref.shape
    p = img_ref.shape[1]
    bf16 = jnp.bfloat16

    tok = tok_ref[...]                                   # (Bb, T, C)  bf16
    img = img_ref[...]                                   # (Bb, P, C)  bf16

    # --- fused projections (flattened over batch for a tall MXU M) ---
    q = jnp.dot(tok.reshape(bb * t, c), wq_ref[...],
                preferred_element_type=jnp.float32).reshape(bb, t, c)
    kv = jnp.dot(img.reshape(bb * p, c), wkv_ref[...],
                 preferred_element_type=jnp.float32).reshape(bb, p, 2 * c)
    # Downcast immediately: kill the f32 (Bb, P, 2C) live range.
    k = (kv[:, :, :c] + pe_k_ref[...][None]).astype(bf16)   # (Bb, P, C) bf16
    v = kv[:, :, c:].astype(bf16)                            # (Bb, P, C) bf16

    # --- cross attention (no explicit transposes; contract last dims) ---
    scale = 1.0 / jnp.sqrt(jnp.float32(c))
    s = jnp.einsum("btc,bpc->btp", q.astype(bf16), k,
                   preferred_element_type=jnp.float32) * scale       # (Bb,T,P)
    col = jax.lax.broadcasted_iota(jnp.int32, s.shape, 2)
    s = jnp.where(col < p_actual, s, -1e30)              # mask padded pixels
    s = s - jnp.max(s, axis=-1, keepdims=True)
    e = jnp.exp(s)
    attn = e * pl.reciprocal(jnp.sum(e, axis=-1, keepdims=True), approx=True)
    tok_out = jnp.einsum("btp,bpc->btc", attn.astype(bf16), v,
                         preferred_element_type=jnp.float32)         # (Bb,T,C)

    # --- hypernetwork mask head (mask token only) ---
    mask_tok = tok_out[:, 0, :]                                      # (Bb, C)
    hyper = jnp.dot(mask_tok.astype(bf16), wh_ref[...],
                    preferred_element_type=jnp.float32)[:, None, :]  # (Bb,1,C)
    logits = jnp.einsum("btc,bpc->btp", hyper.astype(bf16), img,
                        preferred_element_type=jnp.float32)          # (Bb,1,P)
    o_ref[...] = jax.nn.sigmoid(logits).astype(o_ref.dtype)          # (Bb,1,P)


def mask_decoder(tokens, img_emb, pe_k, wq, wkv, wh, *, p_actual, bb=8):
    b, t, c = tokens.shape
    p_pad = img_emb.shape[1]

    bb = min(bb, b)
    if b >= 2:
        bb = min(bb, (b + 1) // 2)       # >= 2 grid steps (v7x has 2 TCs)
    # Auto-shrink bb so the per-step footprint fits the VMEM budget
    # (img bf16 double-buffered + kv f32 temp + k,v bf16  ~= 16*P*C bytes / batch).
    per_b = 16 * p_pad * c
    while bb > 1 and bb * per_b > int(VMEM_LIMIT * 0.6):
        bb //= 2
    b_pad = _round_up(b, bb)
    if b_pad != b:
        tokens = jnp.pad(tokens, ((0, b_pad - b), (0, 0), (0, 0)))
        img_emb = jnp.pad(img_emb, ((0, b_pad - b), (0, 0), (0, 0)))

    kernel = functools.partial(mask_decoder_kernel, p_actual=p_actual)
    out = pl.pallas_call(
        kernel,
        out_shape=jax.ShapeDtypeStruct((b_pad, 1, p_pad), jnp.bfloat16),
        grid=(b_pad // bb,),
        in_specs=[
            pl.BlockSpec((bb, t, c), lambda i: (i, 0, 0)),
            pl.BlockSpec((bb, p_pad, c), lambda i: (i, 0, 0)),
            pl.BlockSpec((p_pad, c), lambda i: (0, 0)),
            pl.BlockSpec((c, c), lambda i: (0, 0)),
            pl.BlockSpec((c, 2 * c), lambda i: (0, 0)),
            pl.BlockSpec((c, c), lambda i: (0, 0)),
        ],
        out_specs=pl.BlockSpec((bb, 1, p_pad), lambda i: (i, 0, 0)),
        compiler_params=pltpu.CompilerParams(
            dimension_semantics=("parallel",),
            vmem_limit_bytes=VMEM_LIMIT),
    )(tokens, img_emb, pe_k, wq, wkv, wh)
    return out[:b, 0, :]


# ================================ glue =====================================
def extract_patches(img_nchw, patch):
    """(B, 3, H, W) NCHW -> (B, gh*gw, 3*patch*patch) channels-last rows."""
    b, c, h, w = img_nchw.shape
    gh, gw = h // patch, w // patch
    x = img_nchw.reshape(b, c, gh, patch, gw, patch)
    x = x.transpose(0, 2, 4, 1, 3, 5)               # (B, gh, gw, C, ph, pw)
    return x.reshape(b, gh * gw, c * patch * patch), (gh, gw)


def fourier_embed(coords01, gauss):
    """coords in [0,1] -> random Fourier features (..., 2*gauss.shape[1])."""
    proj = (2.0 * coords01 - 1.0) @ gauss
    proj = 2.0 * jnp.pi * proj
    return jnp.concatenate([jnp.sin(proj), jnp.cos(proj)], axis=-1)


def bbox_sam_forward(img, points, params):
    """Point-prompt branch of BBox_SAM.forward (text=None, use_sam_actual=False)."""
    b, _, h, w = img.shape
    img_size = w

    # --- image encoder (Pallas kernel 1) ---
    # cast to bf16 BEFORE patch extraction / padding: halves the materialized
    # intermediate traffic feeding the memory-bound patch-embed kernel.
    patches, (gh, gw) = extract_patches(img.astype(jnp.bfloat16), PATCH)
    p = gh * gw
    p_pad = _round_up(p, 16)                        # bf16 sublane alignment only
    if p_pad != p:
        patches = jnp.pad(patches, ((0, 0), (0, p_pad - p), (0, 0)))
    patches = patches.reshape(b * p_pad, PATCH_DIM)
    img_emb = patch_embed(patches, params["w_pe"].astype(jnp.bfloat16),
                          params["b_pe"])
    img_emb = img_emb.reshape(b, p_pad, EMBED)      # (B, P_pad, C) bf16

    # --- prompt encoder (glue: Fourier features of normalized point coords) ---
    sparse = fourier_embed(points / img_size, params["gauss"])        # (B,N,C)
    labels = jnp.ones((b, N_POINTS), jnp.float32)   # point labels == 1
    sparse = sparse + labels[..., None] * params["label_emb"][None, None, :]

    # dense positional encoding of the embedding grid (get_dense_pe analogue).
    # NOTE: pe @ Wk is hoisted here — equivalent to projecting (img + pe) only
    # because the K projection is linear; keep it linear or move this back in.
    gy = (jnp.arange(gh, dtype=jnp.float32) + 0.5) / gh
    gx = (jnp.arange(gw, dtype=jnp.float32) + 0.5) / gw
    grid = jnp.stack(jnp.meshgrid(gx, gy, indexing="xy"), axis=-1)    # (gh,gw,2)
    dense_pe = fourier_embed(grid.reshape(-1, 2), params["gauss"])    # (P, C)
    dense_pe = jnp.pad(dense_pe, ((0, p_pad - p), (0, 0)))            # (P_pad,C)
    pe_k = dense_pe @ params["wk"]                                    # (P_pad,C) f32

    # decoder tokens: [mask token, iou token, point embeddings]
    out_tokens = jnp.broadcast_to(params["out_tokens"][None], (b, 2, EMBED))
    tokens = jnp.concatenate([out_tokens, sparse], axis=1).astype(jnp.bfloat16)

    wkv = jnp.concatenate([params["wk"], params["wv"]],
                          axis=1).astype(jnp.bfloat16)                # (C, 2C)

    # --- mask decoder + sigmoid (Pallas kernel 2, hot path) ---
    low_res = mask_decoder(tokens, img_emb, pe_k,
                           params["wq"].astype(jnp.bfloat16),
                           wkv,
                           params["wh"].astype(jnp.bfloat16),
                           p_actual=p)                                # (B,P_pad) bf16
    low_res = low_res[:, :p].astype(jnp.float32).reshape(b, 1, gh, gw)

    # --- postprocess_masks: upsample to (img_size, img_size) ---
    masks = jnp.repeat(jnp.repeat(low_res, h // gh, axis=2), w // gw, axis=3)
    return masks                                                      # (B,1,H,W)


def init_params(key):
    ks = jax.random.split(key, 9)
    s = lambda d: 1.0 / jnp.sqrt(jnp.float32(d))
    return {
        "w_pe": jax.random.normal(ks[0], (PATCH_DIM, EMBED), jnp.float32) * s(PATCH_DIM),
        "b_pe": jax.random.normal(ks[1], (1, EMBED), jnp.float32) * 0.01,
        "gauss": jax.random.normal(ks[2], (2, EMBED // 2), jnp.float32),
        "label_emb": jax.random.normal(ks[3], (EMBED,), jnp.float32) * 0.02,
        "out_tokens": jax.random.normal(ks[4], (2, EMBED), jnp.float32) * 0.02,
        "wq": jax.random.normal(ks[5], (EMBED, EMBED), jnp.float32) * s(EMBED),
        "wk": jax.random.normal(ks[6], (EMBED, EMBED), jnp.float32) * s(EMBED),
        "wv": jax.random.normal(ks[7], (EMBED, EMBED), jnp.float32) * s(EMBED),
        "wh": jax.random.normal(ks[8], (EMBED, EMBED), jnp.float32) * s(EMBED),
    }


if __name__ == "__main__":
    key = jax.random.PRNGKey(0)
    k_img, k_pts, k_par = jax.random.split(key, 3)

    B, H, W = 2, 32, 32
    img = jax.random.uniform(k_img, (B, 3, H, W), jnp.float32) * 255.0  # NCHW
    points = jax.random.uniform(k_pts, (B, N_POINTS, 2), jnp.float32) * W

    params = init_params(k_par)

    masks = jax.jit(bbox_sam_forward)(img, points, params)
    masks = jax.block_until_ready(masks)

    assert masks.shape == (B, 1, H, W)
    assert bool(jnp.all((masks >= 0.0) & (masks <= 1.0)))
    print("KERNEL_OK")
</pallas_src>

<mosaic_0001>
module attributes {stable_mosaic.version = 11 : i64} {
  func.func @patch_embed_kernel(%arg0: i32, %arg1: memref<16x192xbf16, #tpu.memory_space<vmem>>, %arg2: memref<192x256xbf16, #tpu.memory_space<vmem>>, %arg3: memref<1x256xf32, #tpu.memory_space<vmem>>, %arg4: memref<16x256xbf16, #tpu.memory_space<vmem>>) attributes {dimension_semantics = [#tpu.dimension_semantics<parallel>], iteration_bounds = array<i64: 2>, scalar_prefetch = 0 : i64, scratch_operands = 0 : i64, tpu.core_type = #tpu.core_type<tc>, window_params = [{transform_indices = @transform_0, window_bounds = array<i64: 16, 192>}, {pipeline_mode = #tpu.pipeline_mode<synchronous>, transform_indices = @transform_1, window_bounds = array<i64: 192, 256>}, {pipeline_mode = #tpu.pipeline_mode<synchronous>, transform_indices = @transform_2, window_bounds = array<i64: 1, 256>}, {transform_indices = @transform_3, window_bounds = array<i64: 16, 256>}]} {
    %c0 = arith.constant 0 : index
    %c0_0 = arith.constant 0 : index
    %0 = vector.load %arg1[%c0, %c0_0] : memref<16x192xbf16, #tpu.memory_space<vmem>>, vector<16x192xbf16>
    %c0_1 = arith.constant 0 : index
    %c0_2 = arith.constant 0 : index
    %1 = vector.load %arg2[%c0_1, %c0_2] : memref<192x256xbf16, #tpu.memory_space<vmem>>, vector<192x256xbf16>
    %cst = arith.constant dense<0.000000e+00> : vector<16x256xf32>
    %2 = tpu.matmul %0, %1, %cst {dimension_numbers = #tpu.dot_dimension_numbers<[1], [0], [0], [1], [0, 0, 1, 1], [], []>} : vector<16x192xbf16>, vector<192x256xbf16>, vector<16x256xf32> -> vector<16x256xf32>
    %c0_3 = arith.constant 0 : index
    %c0_4 = arith.constant 0 : index
    %3 = vector.load %arg3[%c0_3, %c0_4] : memref<1x256xf32, #tpu.memory_space<vmem>>, vector<1x256xf32>
    %4 = vector.broadcast %3 : vector<1x256xf32> to vector<16x256xf32>
    %5 = arith.addf %2, %4 : vector<16x256xf32>
    %6 = arith.truncf %5 : vector<16x256xf32> to vector<16x256xbf16>
    %c0_5 = arith.constant 0 : index
    %c0_6 = arith.constant 0 : index
    %7 = vector.load %arg4[%c0_5, %c0_6] : memref<16x256xbf16, #tpu.memory_space<vmem>>, vector<16x256xbf16>
    tpu.vector_store %arg4[%c0_5, %c0_6], %6 {strides = array<i32>} : memref<16x256xbf16, #tpu.memory_space<vmem>>, vector<16x256xbf16>,
    return
  }
  func.func @transform_0(%arg0: i32) -> (i32, i32) {
    %c0_i32 = arith.constant 0 : i32
    %c0_i32_0 = arith.constant 0 : i32
    return %arg0, %c0_i32 : i32, i32
  }
  func.func @transform_1(%arg0: i32) -> (i32, i32) {
    %c0_i32 = arith.constant 0 : i32
    %c0_i32_0 = arith.constant 0 : i32
    %c0_i32_1 = arith.constant 0 : i32
    return %c0_i32, %c0_i32_0 : i32, i32
  }
  func.func @transform_2(%arg0: i32) -> (i32, i32) {
    %c0_i32 = arith.constant 0 : i32
    %c0_i32_0 = arith.constant 0 : i32
    %c0_i32_1 = arith.constant 0 : i32
    return %c0_i32, %c0_i32_0 : i32, i32
  }
  func.func @transform_3(%arg0: i32) -> (i32, i32) {
    %c0_i32 = arith.constant 0 : i32
    %c0_i32_0 = arith.constant 0 : i32
    return %arg0, %c0_i32 : i32, i32
  }
}

module attributes {stable_mosaic.version = 11 : i64} {
  func.func @mask_decoder_kernel(%arg0: i32, %arg1: memref<1x8x256xbf16, #tpu.memory_space<vmem>>, %arg2: memref<1x16x256xbf16, #tpu.memory_space<vmem>>, %arg3: memref<16x256xf32, #tpu.memory_space<vmem>>, %arg4: memref<256x256xbf16, #tpu.memory_space<vmem>>, %arg5: memref<256x512xbf16, #tpu.memory_space<vmem>>, %arg6: memref<256x256xbf16, #tpu.memory_space<vmem>>, %arg7: memref<1x1x16xbf16, #tpu.memory_space<vmem>>) attributes {dimension_semantics = [#tpu.dimension_semantics<parallel>], iteration_bounds = array<i64: 2>, scalar_prefetch = 0 : i64, scratch_operands = 0 : i64, tpu.core_type = #tpu.core_type<tc>, window_params = [{transform_indices = @transform_0, window_bounds = array<i64: 1, 8, 256>}, {transform_indices = @transform_1, window_bounds = array<i64: 1, 16, 256>}, {pipeline_mode = #tpu.pipeline_mode<synchronous>, transform_indices = @transform_2, window_bounds = array<i64: 16, 256>}, {pipeline_mode = #tpu.pipeline_mode<synchronous>, transform_indices = @transform_3, window_bounds = array<i64: 256, 256>}, {pipeline_mode = #tpu.pipeline_mode<synchronous>, transform_indices = @transform_4, window_bounds = array<i64: 256, 512>}, {pipeline_mode = #tpu.pipeline_mode<synchronous>, transform_indices = @transform_5, window_bounds = array<i64: 256, 256>}, {transform_indices = @transform_6, window_bounds = array<i64: 1, 1, 16>}]} {
    %c0 = arith.constant 0 : index
    %c0_0 = arith.constant 0 : index
    %c0_1 = arith.constant 0 : index
    %0 = vector.load %arg1[%c0, %c0_0, %c0_1] : memref<1x8x256xbf16, #tpu.memory_space<vmem>>, vector<1x8x256xbf16>
    %c0_2 = arith.constant 0 : index
    %c0_3 = arith.constant 0 : index
    %c0_4 = arith.constant 0 : index
    %1 = vector.load %arg2[%c0_2, %c0_3, %c0_4] : memref<1x16x256xbf16, #tpu.memory_space<vmem>>, vector<1x16x256xbf16>
    %2 = vector.shape_cast %0 : vector<1x8x256xbf16> to vector<8x256xbf16>
    %c0_5 = arith.constant 0 : index
    %c0_6 = arith.constant 0 : index
    %3 = vector.load %arg4[%c0_5, %c0_6] : memref<256x256xbf16, #tpu.memory_space<vmem>>, vector<256x256xbf16>
    %cst = arith.constant dense<0.000000e+00> : vector<8x256xf32>
    %4 = tpu.matmul %2, %3, %cst {dimension_numbers = #tpu.dot_dimension_numbers<[1], [0], [0], [1], [0, 0, 1, 1], [], []>} : vector<8x256xbf16>, vector<256x256xbf16>, vector<8x256xf32> -> vector<8x256xf32>
    %5 = vector.shape_cast %4 : vector<8x256xf32> to vector<1x8x256xf32>
    %6 = vector.shape_cast %1 : vector<1x16x256xbf16> to vector<16x256xbf16>
    %c0_7 = arith.constant 0 : index
    %c0_8 = arith.constant 0 : index
    %7 = vector.load %arg5[%c0_7, %c0_8] : memref<256x512xbf16, #tpu.memory_space<vmem>>, vector<256x512xbf16>
    %cst_9 = arith.constant dense<0.000000e+00> : vector<16x512xf32>
    %8 = tpu.matmul %6, %7, %cst_9 {dimension_numbers = #tpu.dot_dimension_numbers<[1], [0], [0], [1], [0, 0, 1, 1], [], []>} : vector<16x256xbf16>, vector<256x512xbf16>, vector<16x512xf32> -> vector<16x512xf32>
    %9 = vector.shape_cast %8 : vector<16x512xf32> to vector<1x16x512xf32>
    %10 = vector.extract_strided_slice %9 {offsets = [0, 0, 0], sizes = [1, 16, 256], strides = [1, 1, 1]} : vector<1x16x512xf32> to vector<1x16x256xf32>
    %c0_10 = arith.constant 0 : index
    %c0_11 = arith.constant 0 : index
    %11 = vector.load %arg3[%c0_10, %c0_11] : memref<16x256xf32, #tpu.memory_space<vmem>>, vector<16x256xf32>
    %12 = vector.shape_cast %11 : vector<16x256xf32> to vector<1x16x256xf32>
    %13 = arith.addf %10, %12 : vector<1x16x256xf32>
    %14 = arith.truncf %13 : vector<1x16x256xf32> to vector<1x16x256xbf16>
    %15 = vector.extract_strided_slice %9 {offsets = [0, 0, 256], sizes = [1, 16, 256], strides = [1, 1, 1]} : vector<1x16x512xf32> to vector<1x16x256xf32>
    %16 = arith.truncf %15 : vector<1x16x256xf32> to vector<1x16x256xbf16>
    %cst_12 = arith.constant 2.560000e+02 : f32
    %17 = math.sqrt %cst_12 : f32
    %cst_13 = arith.constant 1.000000e+00 : f32
    %18 = arith.divf %cst_13, %17 : f32
    %19 = arith.truncf %5 : vector<1x8x256xf32> to vector<1x8x256xbf16>
    "tpu.trace_start"() <{level = 10 : i32, message = "btc,bpc->btp"}> : () -> ()
    %cst_14 = arith.constant dense<0.000000e+00> : vector<1x8x16xf32>
    %20 = tpu.matmul %19, %14, %cst_14 {dimension_numbers = #tpu.dot_dimension_numbers<[2], [2], [1], [1], [0, 0, 0, 1, 1, 1], [0], [0]>} : vector<1x8x256xbf16>, vector<1x16x256xbf16>, vector<1x8x16xf32> -> vector<1x8x16xf32>
    "tpu.trace_stop"() : () -> ()
    %21 = vector.broadcast %18 : f32 to vector<1x8x16xf32>
    %22 = arith.mulf %20, %21 : vector<1x8x16xf32>
    %23 = tpu.iota {dimensions = array<i32: 2>} : vector<1x8x16xi32>
    %c16_i32 = arith.constant 16 : i32
    %24 = vector.broadcast %c16_i32 : i32 to vector<1x8x16xi32>
    %25 = arith.cmpi slt, %23, %24 : vector<1x8x16xi32>
    %cst_15 = arith.constant -1.000000e+30 : f32
    %26 = vector.broadcast %cst_15 : f32 to vector<1x8x16xf32>
    %27 = arith.select %25, %22, %26 : vector<1x8x16xi1>, vector<1x8x16xf32>
    %cst_16 = arith.constant dense<0xFF800000> : vector<1x8xf32>
    %28 = vector.multi_reduction <maximumf>, %27, %cst_16 [2] : vector<1x8x16xf32> to vector<1x8xf32>
    %29 = vector.shape_cast %28 : vector<1x8xf32> to vector<1x8x1xf32>
    %30 = vector.broadcast %29 : vector<1x8x1xf32> to vector<1x8x16xf32>
    %31 = arith.subf %27, %30 : vector<1x8x16xf32>
    %32 = math.exp %31 : vector<1x8x16xf32>
    %cst_17 = arith.constant dense<0.000000e+00> : vector<1x8xf32>
    %33 = vector.multi_reduction <add>, %32, %cst_17 [2] : vector<1x8x16xf32> to vector<1x8xf32>
    %34 = vector.shape_cast %33 : vector<1x8xf32> to vector<1x8x1xf32>
    %35 = tpu.reciprocal %34 {approx = true} : vector<1x8x1xf32> -> vector<1x8x1xf32>
    %36 = vector.broadcast %35 : vector<1x8x1xf32> to vector<1x8x16xf32>
    %37 = arith.mulf %32, %36 : vector<1x8x16xf32>
    %38 = arith.truncf %37 : vector<1x8x16xf32> to vector<1x8x16xbf16>
    "tpu.trace_start"() <{level = 10 : i32, message = "btp,bpc->btc"}> : () -> ()
    %cst_18 = arith.constant dense<0.000000e+00> : vector<1x8x256xf32>
    %39 = tpu.matmul %38, %16, %cst_18 {dimension_numbers = #tpu.dot_dimension_numbers<[2], [1], [1], [2], [0, 0, 0, 1, 1, 2], [0], [0]>} : vector<1x8x16xbf16>, vector<1x16x256xbf16>, vector<1x8x256xf32> -> vector<1x8x256xf32>
    "tpu.trace_stop"() : () -> ()
    %40 = vector.extract_strided_slice %39 {offsets = [0, 0, 0], sizes = [1, 1, 256], strides = [1, 1, 1]} : vector<1x8x256xf32> to vector<1x1x256xf32>
    %41 = vector.shape_cast %40 : vector<1x1x256xf32> to vector<1x256xf32>
    %42 = arith.truncf %41 : vector<1x256xf32> to vector<1x256xbf16>
    %c0_19 = arith.constant 0 : index
    %c0_20 = arith.constant 0 : index
    %43 = vector.load %arg6[%c0_19, %c0_20] : memref<256x256xbf16, #tpu.memory_space<vmem>>, vector<256x256xbf16>
    %cst_21 = arith.constant dense<0.000000e+00> : vector<1x256xf32>
    %44 = tpu.matmul %42, %43, %cst_21 {dimension_numbers = #tpu.dot_dimension_numbers<[1], [0], [0], [1], [0, 0, 1, 1], [], []>} : vector<1x256xbf16>, vector<256x256xbf16>, vector<1x256xf32> -> vector<1x256xf32>
    %45 = vector.shape_cast %44 : vector<1x256xf32> to vector<1x1x256xf32>
    %46 = arith.truncf %45 : vector<1x1x256xf32> to vector<1x1x256xbf16>
    "tpu.trace_start"() <{level = 10 : i32, message = "btc,bpc->btp"}> : () -> ()
    %cst_22 = arith.constant dense<0.000000e+00> : vector<1x1x16xf32>
    %47 = tpu.matmul %46, %1, %cst_22 {dimension_numbers = #tpu.dot_dimension_numbers<[2], [2], [1], [1], [0, 0, 0, 1, 1, 1], [0], [0]>} : vector<1x1x256xbf16>, vector<1x16x256xbf16>, vector<1x1x16xf32> -> vector<1x1x16xf32>
    "tpu.trace_stop"() : () -> ()
    %48 = arith.negf %47 : vector<1x1x16xf32>
    %49 = math.exp %48 : vector<1x1x16xf32>
    %cst_23 = arith.constant 1.000000e+00 : f32
    %50 = vector.broadcast %cst_23 : f32 to vector<1x1x16xf32>
    %51 = arith.addf %50, %49 : vector<1x1x16xf32>
    %52 = arith.divf %50, %51 : vector<1x1x16xf32>
    %53 = arith.truncf %52 : vector<1x1x16xf32> to vector<1x1x16xbf16>
    %c0_24 = arith.constant 0 : index
    %c0_25 = arith.constant 0 : index
    %c0_26 = arith.constant 0 : index
    %54 = vector.load %arg7[%c0_24, %c0_25, %c0_26] : memref<1x1x16xbf16, #tpu.memory_space<vmem>>, vector<1x1x16xbf16>
    tpu.vector_store %arg7[%c0_24, %c0_25, %c0_26], %53 {strides = array<i32>} : memref<1x1x16xbf16, #tpu.memory_space<vmem>>, vector<1x1x16xbf16>,
    return
  }
  func.func @transform_0(%arg0: i32) -> (i32, i32, i32) {
    %c0_i32 = arith.constant 0 : i32
    %c0_i32_0 = arith.constant 0 : i32
    %c0_i32_1 = arith.constant 0 : i32
    return %arg0, %c0_i32, %c0_i32_0 : i32, i32, i32
  }
  func.func @transform_1(%arg0: i32) -> (i32, i32, i32) {
    %c0_i32 = arith.constant 0 : i32
    %c0_i32_0 = arith.constant 0 : i32
    %c0_i32_1 = arith.constant 0 : i32
    return %arg0, %c0_i32, %c0_i32_0 : i32, i32, i32
  }
  func.func @transform_2(%arg0: i32) -> (i32, i32) {
    %c0_i32 = arith.constant 0 : i32
    %c0_i32_0 = arith.constant 0 : i32
    %c0_i32_1 = arith.constant 0 : i32
    return %c0_i32, %c0_i32_0 : i32, i32
  }
  func.func @transform_3(%arg0: i32) -> (i32, i32) {
    %c0_i32 = arith.constant 0 : i32
    %c0_i32_0 = arith.constant 0 : i32
    %c0_i32_1 = arith.constant 0 : i32
    return %c0_i32, %c0_i32_0 : i32, i32
  }
  func.func @transform_4(%arg0: i32) -> (i32, i32) {
    %c0_i32 = arith.constant 0 : i32
    %c0_i32_0 = arith.constant 0 : i32
    %c0_i32_1 = arith.constant 0 : i32
    return %c0_i32, %c0_i32_0 : i32, i32
  }
  func.func @transform_5(%arg0: i32) -> (i32, i32) {
    %c0_i32 = arith.constant 0 : i32
    %c0_i32_0 = arith.constant 0 : i32
    %c0_i32_1 = arith.constant 0 : i32
    return %c0_i32, %c0_i32_0 : i32, i32
  }
  func.func @transform_6(%arg0: i32) -> (i32, i32, i32) {
    %c0_i32 = arith.constant 0 : i32
    %c0_i32_0 = arith.constant 0 : i32
    %c0_i32_1 = arith.constant 0 : i32
    return %arg0, %c0_i32, %c0_i32_0 : i32, i32, i32
  }
}

</mosaic_0001>

<llo_original>
// kernel: bbox_sam_forward.2
$region0: #{bbox_sam_forward.2}
  #allocation0 [shape = 'u32[]', space=smem, size = 0x4, offset = 0x4, fixed_abs, tag = 'smem constant byte address 0x4 - core index']
  #allocation1 [shape = 'u32[144,128]{1,0:T(1,128)}', space=vmem, size = 0x12000, scoped, tag = 'internal scratch']
  %s0 = inlined_call_operand.vmem [shape: bf16[32,192], index: 0, kind: input, shape index: {}]
  %s1 = inlined_call_operand.vmem [shape: bf16[192,256], index: 1, kind: input, shape index: {}]
  %s2 = inlined_call_operand.vmem [shape: f32[1,256], index: 2, kind: input, shape index: {}]
  %s3 = inlined_call_operand.vmem [shape: bf16[32,256], index: 3, kind: output, shape index: {}]
  %s4 = sld [smem:[#allocation0]]
  $region45: #{bbox_sam_forward.2} parent=0
    _
  %s6 = ssub.s32 1, %s4
  %s7 = scalar_select 0, %s6, %s4
  loop: start=0, step=1, limit=4
  $region2: #{bbox_sam_forward.2} parent=0 // loop_pre_header
    _
  $region3: #{bbox_sam_forward.2} parent=0 // loop_header
    %s9 = sphi 0, %s13
    %p10 = scmp.ge.s32.totalorder %s9, 4
    %s19 = sphi 0, %s21
    %s22 = sphi 0, %s19
    %s23 = sphi 0, %s22
    %s39 = sphi 0, %s23
    %s43 = sphi 0, %s43
    %s45 = sphi 0, %s43
    %s46 = sphi 0, %s45
    %s60 = sphi 0, %s46
    %s64 = sphi 0, %s64
    %s66 = sphi 0, %s64
    %s67 = sphi 0, %s66
    %s81 = sphi 0, %s67
    %s87 = sphi 0, %s89
    %s90 = sphi 0, %s87
    %s91 = sphi 0, %s90
    %s107 = sphi 0, %s91
  $region4: #{bbox_sam_forward.2} parent=0 // loop_header_branch
    %12 = sbr.rel (%p10) target = $region8
  $region5: #{bbox_sam_forward.2} parent=0 // loop_body
    %s14 = ssub.s32 %s9, 1
    %s15 = ssub.s32 %s9, 2
    %s16 = sadd.s32 %s9, 1
    %s17 = ssub.s32 %s9, %s16
    %p18 = scmp.eq.s32.totalorder %s17, 0
    %s20 = sadd.s32 %s19, 1
    %s21 = scalar_select %p18, %s19, %s20
    %p24 = pneg %p18
    %p25 = scmp.eq.s32.totalorder %s9, 1
    %p26 = por %p24, %p25
    %p27 = scmp.ne.s32.totalorder %s19, %s22
    %p28 = scmp.eq.s32.totalorder %s9, 0
    %p29 = por %p27, %p28
    %p30 = scmp.ne.s32.totalorder %s19, %s22
    %p31 = scmp.eq.s32.totalorder %s14, 1
    %p32 = por %p30, %p31
    %p33 = scmp.ne.s32.totalorder %s22, %s23
    %p34 = scmp.eq.s32.totalorder %s14, 0
    %p35 = por %p33, %p34
    %p36 = scmp.ne.s32.totalorder %s22, %s23
    %p37 = scmp.eq.s32.totalorder %s15, 1
    %p38 = por %p36, %p37
    %p40 = scmp.ne.s32.totalorder %s23, %s39
    %p41 = scmp.eq.s32.totalorder %s15, 0
    %p42 = por %p40, %p41
    %s44 = sadd.s32 %s43, 1
    %p47 = scmp.eq.s32.totalorder %s9, 1
    %p48 = scmp.ne.s32.totalorder %s43, %s45
    %p49 = scmp.eq.s32.totalorder %s9, 0
    %p50 = por %p48, %p49
    %p51 = scmp.ne.s32.totalorder %s43, %s45
    %p52 = scmp.eq.s32.totalorder %s14, 1
    %p53 = por %p51, %p52
    %p54 = scmp.ne.s32.totalorder %s45, %s46
    %p55 = scmp.eq.s32.totalorder %s14, 0
    %p56 = por %p54, %p55
    %p57 = scmp.ne.s32.totalorder %s45, %s46
    %p58 = scmp.eq.s32.totalorder %s15, 1
    %p59 = por %p57, %p58
    %p61 = scmp.ne.s32.totalorder %s46, %s60
    %p62 = scmp.eq.s32.totalorder %s15, 0
    %p63 = por %p61, %p62
    %s65 = sadd.s32 %s64, 1
    %p68 = scmp.eq.s32.totalorder %s9, 1
    %p69 = scmp.ne.s32.totalorder %s64, %s66
    %p70 = scmp.eq.s32.totalorder %s9, 0
    %p71 = por %p69, %p70
    %p72 = scmp.ne.s32.totalorder %s64, %s66
    %p73 = scmp.eq.s32.totalorder %s14, 1
    %p74 = por %p72, %p73
    %p75 = scmp.ne.s32.totalorder %s66, %s67
    %p76 = scmp.eq.s32.totalorder %s14, 0
    %p77 = por %p75, %p76
    %p78 = scmp.ne.s32.totalorder %s66, %s67
    %p79 = scmp.eq.s32.totalorder %s15, 1
    %p80 = por %p78, %p79
    %p82 = scmp.ne.s32.totalorder %s67, %s81
    %p83 = scmp.eq.s32.totalorder %s15, 0
    %p84 = por %p82, %p83
    %s85 = ssub.s32 %s9, %s16
    %p86 = scmp.eq.s32.totalorder %s85, 0
    %s88 = sadd.s32 %s87, 1
    %s89 = scalar_select %p86, %s87, %s88
    %p92 = pneg %p86
    %p93 = scmp.eq.s32.totalorder %s9, 1
    %p94 = por %p92, %p93
    %p95 = scmp.ne.s32.totalorder %s87, %s90
    %p96 = scmp.eq.s32.totalorder %s9, 0
    %p97 = por %p95, %p96
    %p98 = scmp.ne.s32.totalorder %s87, %s90
    %p99 = scmp.eq.s32.totalorder %s14, 1
    %p100 = por %p98, %p99
    %p101 = scmp.ne.s32.totalorder %s90, %s91
    %p102 = scmp.eq.s32.totalorder %s14, 0
    %p103 = por %p101, %p102
    %p104 = scmp.ne.s32.totalorder %s90, %s91
    %p105 = scmp.eq.s32.totalorder %s15, 1
    %p106 = por %p104, %p105
    %p108 = scmp.ne.s32.totalorder %s91, %s107
    %p109 = scmp.eq.s32.totalorder %s15, 0
    %p110 = por %p108, %p109
    %p111 = scmp.le.s32.totalorder 1, %s9
    %p112 = scmp.lt.s32.totalorder %s9, 3
    %p113 = pnand %p111, %p112
    %p114 = pneg %p113
    // Predicated region
    $region9: #{bbox_sam_forward.2} parent=5 // pred_check
      _
    $region10: #{bbox_sam_forward.2} parent=5 // pred_check_branch
      %116 = sbr.rel (%p113) target = $region12
    $region11: #{bbox_sam_forward.2} parent=5 // pred_region
      %s117 = ssub.s32 %s9, 1
      // Predicated region
      $region13: #{bbox_sam_forward.2} parent=11 // pred_check
        %p118 = pneg %p56
      $region14: #{bbox_sam_forward.2} parent=11 // pred_check_branch
        %120 = sbr.rel (%p118) target = $region16
      $region15: #{bbox_sam_forward.2} parent=11 // pred_region
        _
      $region16: #{bbox_sam_forward.2} parent=11 // pred_fallthru
        _
      // Predicated region
      $region17: #{bbox_sam_forward.2} parent=11 // pred_check
        %p121 = pneg %p77
      $region18: #{bbox_sam_forward.2} parent=11 // pred_check_branch
        %123 = sbr.rel (%p121) target = $region20
      $region19: #{bbox_sam_forward.2} parent=11 // pred_region
        _
      $region20: #{bbox_sam_forward.2} parent=11 // pred_fallthru
        _
    $region12: #{bbox_sam_forward.2} parent=5 // pred_fallthru
      _
    %p124 = scmp.lt.s32.totalorder %s9, 2
    // Predicated region
    $region21: #{bbox_sam_forward.2} parent=5 // pred_check
      %p125 = pneg %p124
    $region22: #{bbox_sam_forward.2} parent=5 // pred_check_branch
      %127 = sbr.rel (%p125) target = $region24
    $region23: #{bbox_sam_forward.2} parent=5 // pred_region
      // Predicated region
      $region25: #{bbox_sam_forward.2} parent=23 // pred_check
        %p128 = pneg %p29
      $region26: #{bbox_sam_forward.2} parent=23 // pred_check_branch
        %130 = sbr.rel (%p128) target = $region28
      $region27: #{bbox_sam_forward.2} parent=23 // pred_region
        %s131 = smul.u32 2, %s9
        %p132 = scmp.lt.s32.totalorder %s131, 3
        %s133 = scalar_select %p132, %s131, 3
        %s134 = smul.addr %s133, 2
        %s135 = smul.addr %s134, 4
        %s136 = scalar_lea.vmem %s0, %s135
        %s137 = smul.u32 2, %s9
      $region28: #{bbox_sam_forward.2} parent=23 // pred_fallthru
        _
    $region24: #{bbox_sam_forward.2} parent=5 // pred_fallthru
      _
    %p138 = scmp.le.s32.totalorder 1, %s9
    %p139 = scmp.lt.s32.totalorder %s9, 3
    %p140 = pnand %p138, %p139
    %p141 = pneg %p140
    // Predicated region
    $region29: #{bbox_sam_forward.2} parent=5 // pred_check
      _
    $region30: #{bbox_sam_forward.2} parent=5 // pred_check_branch
      %143 = sbr.rel (%p140) target = $region32
    $region31: #{bbox_sam_forward.2} parent=5 // pred_region
      %s144 = ssub.s32 %s9, 1
      %s145 = smul.u32 2, %s14
      %p146 = scmp.lt.s32.totalorder %s145, 3
      %s147 = scalar_select %p146, %s145, 3
      %s148 = smul.addr %s147, 2
      %s149 = smul.addr %s148, 4
      %s150 = scalar_lea.vmem %s0, %s149
      %p151 = pneg %p35
      %p152 = pneg %p32
      %p153 = pneg %p56
      %p154 = pneg %p53
      %p155 = pneg %p77
      %p156 = pneg %p74
      %p157 = pneg %p103
      %p158 = pneg %p100
      %s159 = smul.u32 2, %s14
      %p160 = scmp.lt.s32.totalorder %s159, 3
      %s161 = scalar_select %p160, %s159, 3
      %s162 = smul.addr %s161, 2
      %s163 = smul.addr %s162, 4
      %s164 = scalar_lea.vmem %s3, %s163
      %s165 = smul.u32 2, %s14
      %p166 = scmp.lt.s32.totalorder %s165, 3
      %s167 = scalar_select %p166, %s165, 3
      %s168 = smul.addr %s167, 2
      %s169 = smul.addr %s168, 4
      %s170 = scalar_lea.vmem %s0, %s169
      %s171 = smul.u32 2, %s14
      %s172 = smul.u32 2, %s14
      %p173 = scmp.lt.s32.totalorder %s172, 3
      %s174 = scalar_select %p173, %s172, 3
      %s175 = smul.addr %s174, 2
      %s176 = smul.addr %s175, 4
      %s177 = scalar_lea.vmem %s3, %s176
      %s178 = smul.u32 2, %s14
      %v180 = vld [vmem:[%s170] sm:$0xff]
      %v181 = vld [vmem:[%s170 + $0x8] sm:$0xff]
      %v182 = vld [vmem:[%s1] sm:$0xff]
      %v183 = vld [vmem:[%s1 + $0x8] sm:$0xff]
      %v184 = vld [vmem:[%s1 + $0x10] sm:$0xff]
      %v185 = vld [vmem:[%s1 + $0x18] sm:$0xff]
      %v186 = vld [vmem:[%s1 + $0x20] sm:$0xff]
      %v187 = vld [vmem:[%s1 + $0x28] sm:$0xff]
      %v188 = vld [vmem:[%s1 + $0x30] sm:$0xff]
      %v189 = vld [vmem:[%s1 + $0x38] sm:$0xff]
      %v190 = vld [vmem:[%s1 + $0x40] sm:$0xff]
      %v191 = vld [vmem:[%s1 + $0x48] sm:$0xff]
      %v192 = vld [vmem:[%s1 + $0x50] sm:$0xff]
      %v193 = vld [vmem:[%s1 + $0x58] sm:$0xff]
      %v194 = vld [vmem:[%s1 + $0x60] sm:$0xff]
      %v195 = vld [vmem:[%s1 + $0x68] sm:$0xff]
      %v196 = vld [vmem:[%s1 + $0x70] sm:$0xff]
      %v197 = vld [vmem:[%s1 + $0x78] sm:$0xff]
      %v198 = vld [vmem:[%s1 + $0x80] sm:$0xff]
      %v199 = vld [vmem:[%s1 + $0x88] sm:$0xff]
      %v200 = vld [vmem:[%s1 + $0x90] sm:$0xff]
      %v201 = vld [vmem:[%s1 + $0x98] sm:$0xff]
      %v202 = vld [vmem:[%s1 + $0xa0] sm:$0xff]
      %v203 = vld [vmem:[%s1 + $0xa8] sm:$0xff]
      %v204 = vld [vmem:[%s1 + $0xb0] sm:$0xff]
      %v205 = vld [vmem:[%s1 + $0xb8] sm:$0xff]
      %v206 = vld [vmem:[%s2] sm:$0x3]
      %v208 = vlaneseq
      %v209 = vshrl.u32 %v208, 7
      %v210 = vsub.s32 0, %v209
      %v211 = vrot.slane %v206, %v210
      %v212 = vlaneseq
      %v213 = vshrl.u32 %v212, 7
      %v214 = vsub.s32 1, %v213
      %v215 = vrot.slane %v206, %v214
      %v220 = vunpack.c.l.b16 %v180
      %v221 = vunpack.c.h.b16 %v180
      %v222 = vunpack.c.l.b16 %v181
      %v223 = vunpack.c.h.b16 %v181
      %v224 = vpack.c.b16 %v222, %v220
      %v225 = vpack.c.b16 %v223, %v221
      %v251 = vunpack.c.l.b16 %v182
      %v252 = vunpack.c.h.b16 %v182
      %v253 = vunpack.c.l.b16 %v183
      %v254 = vunpack.c.h.b16 %v183
      %v255 = vunpack.c.l.b16 %v184
      %v256 = vunpack.c.h.b16 %v184
      %v257 = vunpack.c.l.b16 %v185
      %v258 = vunpack.c.h.b16 %v185
      %v259 = vunpack.c.l.b16 %v186
      %v260 = vunpack.c.h.b16 %v186
      %v261 = vunpack.c.l.b16 %v187
      %v262 = vunpack.c.h.b16 %v187
      %v263 = vunpack.c.l.b16 %v188
      %v264 = vunpack.c.h.b16 %v188
      %v265 = vunpack.c.l.b16 %v189
      %v266 = vunpack.c.h.b16 %v189
      %v267 = vunpack.c.l.b16 %v190
      %v268 = vunpack.c.h.b16 %v190
      %v269 = vunpack.c.l.b16 %v191
      %v270 = vunpack.c.h.b16 %v191
      %v271 = vunpack.c.l.b16 %v192
      %v272 = vunpack.c.h.b16 %v192
      %v273 = vunpack.c.l.b16 %v193
      %v274 = vunpack.c.h.b16 %v193
      %v275 = vunpack.c.l.b16 %v194
      %v276 = vunpack.c.h.b16 %v194
      %v277 = vunpack.c.l.b16 %v195
      %v278 = vunpack.c.h.b16 %v195
      %v279 = vunpack.c.l.b16 %v196
      %v280 = vunpack.c.h.b16 %v196
      %v281 = vunpack.c.l.b16 %v197
      %v282 = vunpack.c.h.b16 %v197
      %v283 = vunpack.c.l.b16 %v198
      %v284 = vunpack.c.h.b16 %v198
      %v285 = vunpack.c.l.b16 %v199
      %v286 = vunpack.c.h.b16 %v199
      %v287 = vunpack.c.l.b16 %v200
      %v288 = vunpack.c.h.b16 %v200
      %v289 = vunpack.c.l.b16 %v201
      %v290 = vunpack.c.h.b16 %v201
      %v291 = vunpack.c.l.b16 %v202
      %v292 = vunpack.c.h.b16 %v202
      %v293 = vunpack.c.l.b16 %v203
      %v294 = vunpack.c.h.b16 %v203
      %v295 = vunpack.c.l.b16 %v204
      %v296 = vunpack.c.h.b16 %v204
      %v297 = vunpack.c.l.b16 %v205
      %v298 = vunpack.c.h.b16 %v205
      %v299 = vpack.c.b16 %v253, %v251
      %v300 = vpack.c.b16 %v254, %v252
      %v301 = vpack.c.b16 %v257, %v255
      %v302 = vpack.c.b16 %v258, %v256
      %v303 = vpack.c.b16 %v261, %v259
      %v304 = vpack.c.b16 %v262, %v260
      %v305 = vpack.c.b16 %v265, %v263
      %v306 = vpack.c.b16 %v266, %v264
      %v307 = vpack.c.b16 %v269, %v267
      %v308 = vpack.c.b16 %v270, %v268
      %v309 = vpack.c.b16 %v273, %v271
      %v310 = vpack.c.b16 %v274, %v272
      %v311 = vpack.c.b16 %v277, %v275
      %v312 = vpack.c.b16 %v278, %v276
      %v313 = vpack.c.b16 %v281, %v279
      %v314 = vpack.c.b16 %v282, %v280
      %v315 = vpack.c.b16 %v285, %v283
      %v316 = vpack.c.b16 %v286, %v284
      %v317 = vpack.c.b16 %v289, %v287
      %v318 = vpack.c.b16 %v290, %v288
      %v319 = vpack.c.b16 %v293, %v291
      %v320 = vpack.c.b16 %v294, %v292
      %v321 = vpack.c.b16 %v297, %v295
      %v322 = vpack.c.b16 %v298, %v296
      %vm347 = vcmask 523264
      %v349 = vsel %vm347, %v225, 0
      %351 = vmatprep.subr.bf16.mxu0 %v300
      %352 = vmatpush1.bf16.msra.mxu0 %v299
      %353 = vmatprep.subr.bf16.mxu0 %v302
      %354 = vmatpush1.bf16.msra.mxu0 %v301
      %355 = vmatprep.subr.bf16.mxu0 %v304
      %356 = vmatpush1.bf16.msra.mxu0 %v303
      %357 = vmatprep.subr.bf16.mxu0 %v306
      %358 = vmatpush1.bf16.msra.mxu0 %v305
      %359 = vmatprep.subr.bf16.mxu0 %v308
      %360 = vmatpush1.bf16.msra.mxu0 %v307
      %361 = vmatprep.subr.bf16.mxu0 %v310
      %362 = vmatpush1.bf16.msra.mxu0 %v309
      %363 = vmatprep.subr.bf16.mxu0 %v312
      %364 = vmatpush1.bf16.msra.mxu0 %v311
      %365 = vmatprep.subr.bf16.mxu0 %v314
      %366 = vmatpush1.bf16.msra.mxu0 %v313
      %367 = vmatprep.subr.bf16.mxu0 %v316
      %368 = vmatpush1.bf16.msra.mxu0 %v315
      %369 = vmatprep.subr.bf16.mxu0 %v318
      %370 = vmatpush1.bf16.msra.mxu0 %v317
      %371 = vmatprep.subr.bf16.mxu0 %v320
      %372 = vmatpush1.bf16.msra.mxu0 %v319
      %373 = vmatprep.subr.bf16.mxu0 %v322
      %374 = vmatpush1.bf16.msra.mxu0 %v321
      %375 = vmatprep.subr.bf16.mxu0 0
      %376 = vmatpush1.bf16.msra.mxu0 0
      %377 = vmatprep.subr.bf16.mxu0 0
      %378 = vmatpush1.bf16.msra.mxu0 0
      %379 = vmatprep.subr.bf16.mxu0 0
      %380 = vmatpush1.bf16.msra.mxu0 0
      %381 = vmatprep.subr.bf16.mxu0 0
      %382 = vmatpush1.bf16.msra.mxu0 0
      %383 = vmatprep.mubr.bf16.mxu0 %v349
      %384 = vmatmul.mubr.bf16.gmra.mrb[0].mxu0 %v224
      %v385 = vpop.f32.mrb[0].mxu0
      %v386 = vadd.f32 %v211, %v385
      %v387 = vpop.f32.mrb[0].mxu0
      %v388 = vadd.f32 %v215, %v387
      %v389 = vpop.f32.mrb[0].mxu0
      %v390 = vadd.f32 %v211, %v389
      %v391 = vpop.f32.mrb[0].mxu0
      %v392 = vadd.f32 %v215, %v391
      %393 = vdwg.mxu0
      %v394 = vpack.c.bf16 %v390, %v386
      %v395 = vpack.c.bf16 %v392, %v388
      %v398 = vunpack.c.l.b16 %v394
      %v399 = vunpack.c.l.b16 %v395
      %v400 = vunpack.c.h.b16 %v394
      %v401 = vunpack.c.h.b16 %v395
      %v402 = vpack.c.b16 %v399, %v398
      %v403 = vpack.c.b16 %v401, %v400
      %406 = vst [vmem:[%s177] sm:$0xff] %v402
      %407 = vst [vmem:[%s177 + $0x8] sm:$0xff] %v403
      %s408 = smul.u32 2, %s14
      %p409 = scmp.lt.s32.totalorder %s408, 3
      %s410 = scalar_select %p409, %s408, 3
      %s411 = smul.addr %s410, 2
      %s412 = smul.addr %s411, 4
      %s413 = scalar_lea.vmem %s3, %s412
      // Predicated region
      $region33: #{bbox_sam_forward.2} parent=31 // pred_check
        %p414 = pneg %p100
      $region34: #{bbox_sam_forward.2} parent=31 // pred_check_branch
        %416 = sbr.rel (%p414) target = $region36
      $region35: #{bbox_sam_forward.2} parent=31 // pred_region
        %s417 = smul.u32 2, %s14
      $region36: #{bbox_sam_forward.2} parent=31 // pred_fallthru
        _
    $region32: #{bbox_sam_forward.2} parent=5 // pred_fallthru
      _
    %p418 = scmp.le.s32.totalorder 2, %s9
    // Predicated region
    $region37: #{bbox_sam_forward.2} parent=5 // pred_check
      %p419 = pneg %p418
    $region38: #{bbox_sam_forward.2} parent=5 // pred_check_branch
      %421 = sbr.rel (%p419) target = $region40
    $region39: #{bbox_sam_forward.2} parent=5 // pred_region
      %s422 = ssub.s32 %s9, 2
      // Predicated region
      $region41: #{bbox_sam_forward.2} parent=39 // pred_check
        %p423 = pneg %p106
      $region42: #{bbox_sam_forward.2} parent=39 // pred_check_branch
        %425 = sbr.rel (%p423) target = $region44
      $region43: #{bbox_sam_forward.2} parent=39 // pred_region
        %s426 = smul.u32 2, %s15
        %p427 = scmp.lt.s32.totalorder %s426, 3
        %s428 = scalar_select %p427, %s426, 3
        %s429 = smul.addr %s428, 2
        %s430 = smul.addr %s429, 4
        %s431 = scalar_lea.vmem %s3, %s430
      $region44: #{bbox_sam_forward.2} parent=39 // pred_fallthru
        _
    $region40: #{bbox_sam_forward.2} parent=5 // pred_fallthru
      _
  $region6: #{bbox_sam_forward.2} parent=0 // loop_footer
    %s13 = sadd.s32 1, %s9
  $region7: #{bbox_sam_forward.2} parent=0 // loop_footer_branch
    %8 = sbr.rel target = $region3
  $region8: #{bbox_sam_forward.2} parent=0 // loop_exit
    _

// kernel: bbox_sam_forward.3
$region0: #{bbox_sam_forward.3}
  #allocation0 [shape = 'u32[]', space=smem, size = 0x4, offset = 0x4, fixed_abs, tag = 'smem constant byte address 0x4 - core index']
  #allocation1 [shape = 'u32[144,128]{1,0:T(1,128)}', space=vmem, size = 0x12000, scoped, tag = 'internal scratch']
  %s0 = inlined_call_operand.vmem [shape: bf16[2,8,256], index: 0, kind: input, shape index: {}]
  %s1 = inlined_call_operand.vmem [shape: bf16[2,16,256], index: 1, kind: input, shape index: {}]
  %s2 = inlined_call_operand.vmem [shape: f32[16,256], index: 2, kind: input, shape index: {}]
  %s3 = inlined_call_operand.vmem [shape: bf16[256,256], index: 3, kind: input, shape index: {}]
  %s4 = inlined_call_operand.vmem [shape: bf16[256,512], index: 4, kind: input, shape index: {}]
  %s5 = inlined_call_operand.vmem [shape: bf16[256,256], index: 5, kind: input, shape index: {}]
  %s6 = inlined_call_operand.vmem [shape: bf16[2,1,16], index: 6, kind: output, shape index: {}]
  %s7 = sld [smem:[#allocation0]]
  $region57: #{bbox_sam_forward.3} parent=0
    _
  %s9 = ssub.s32 1, %s7
  %s10 = scalar_select 0, %s9, %s7
  loop: start=0, step=1, limit=4
  $region2: #{bbox_sam_forward.3} parent=0 // loop_pre_header
    _
  $region3: #{bbox_sam_forward.3} parent=0 // loop_header
    %s12 = sphi 0, %s16
    %p13 = scmp.ge.s32.totalorder %s12, 4
    %s22 = sphi 0, %s24
    %s25 = sphi 0, %s22
    %s26 = sphi 0, %s25
    %s42 = sphi 0, %s26
    %s48 = sphi 0, %s50
    %s51 = sphi 0, %s48
    %s52 = sphi 0, %s51
    %s68 = sphi 0, %s52
    %s72 = sphi 0, %s72
    %s74 = sphi 0, %s72
    %s75 = sphi 0, %s74
    %s89 = sphi 0, %s75
    %s93 = sphi 0, %s93
    %s95 = sphi 0, %s93
    %s96 = sphi 0, %s95
    %s110 = sphi 0, %s96
    %s114 = sphi 0, %s114
    %s116 = sphi 0, %s114
    %s117 = sphi 0, %s116
    %s131 = sphi 0, %s117
    %s135 = sphi 0, %s135
    %s137 = sphi 0, %s135
    %s138 = sphi 0, %s137
    %s152 = sphi 0, %s138
    %s158 = sphi 0, %s160
    %s161 = sphi 0, %s158
    %s162 = sphi 0, %s161
    %s178 = sphi 0, %s162
  $region4: #{bbox_sam_forward.3} parent=0 // loop_header_branch
    %15 = sbr.rel (%p13) target = $region8
  $region5: #{bbox_sam_forward.3} parent=0 // loop_body
    %s17 = ssub.s32 %s12, 1
    %s18 = ssub.s32 %s12, 2
    %s19 = sadd.s32 %s12, 1
    %s20 = ssub.s32 %s12, %s19
    %p21 = scmp.eq.s32.totalorder %s20, 0
    %s23 = sadd.s32 %s22, 1
    %s24 = scalar_select %p21, %s22, %s23
    %p27 = pneg %p21
    %p28 = scmp.eq.s32.totalorder %s12, 1
    %p29 = por %p27, %p28
    %p30 = scmp.ne.s32.totalorder %s22, %s25
    %p31 = scmp.eq.s32.totalorder %s12, 0
    %p32 = por %p30, %p31
    %p33 = scmp.ne.s32.totalorder %s22, %s25
    %p34 = scmp.eq.s32.totalorder %s17, 1
    %p35 = por %p33, %p34
    %p36 = scmp.ne.s32.totalorder %s25, %s26
    %p37 = scmp.eq.s32.totalorder %s17, 0
    %p38 = por %p36, %p37
    %p39 = scmp.ne.s32.totalorder %s25, %s26
    %p40 = scmp.eq.s32.totalorder %s18, 1
    %p41 = por %p39, %p40
    %p43 = scmp.ne.s32.totalorder %s26, %s42
    %p44 = scmp.eq.s32.totalorder %s18, 0
    %p45 = por %p43, %p44
    %s46 = ssub.s32 %s12, %s19
    %p47 = scmp.eq.s32.totalorder %s46, 0
    %s49 = sadd.s32 %s48, 1
    %s50 = scalar_select %p47, %s48, %s49
    %p53 = pneg %p47
    %p54 = scmp.eq.s32.totalorder %s12, 1
    %p55 = por %p53, %p54
    %p56 = scmp.ne.s32.totalorder %s48, %s51
    %p57 = scmp.eq.s32.totalorder %s12, 0
    %p58 = por %p56, %p57
    %p59 = scmp.ne.s32.totalorder %s48, %s51
    %p60 = scmp.eq.s32.totalorder %s17, 1
    %p61 = por %p59, %p60
    %p62 = scmp.ne.s32.totalorder %s51, %s52
    %p63 = scmp.eq.s32.totalorder %s17, 0
    %p64 = por %p62, %p63
    %p65 = scmp.ne.s32.totalorder %s51, %s52
    %p66 = scmp.eq.s32.totalorder %s18, 1
    %p67 = por %p65, %p66
    %p69 = scmp.ne.s32.totalorder %s52, %s68
    %p70 = scmp.eq.s32.totalorder %s18, 0
    %p71 = por %p69, %p70
    %s73 = sadd.s32 %s72, 1
    %p76 = scmp.eq.s32.totalorder %s12, 1
    %p77 = scmp.ne.s32.totalorder %s72, %s74
    %p78 = scmp.eq.s32.totalorder %s12, 0
    %p79 = por %p77, %p78
    %p80 = scmp.ne.s32.totalorder %s72, %s74
    %p81 = scmp.eq.s32.totalorder %s17, 1
    %p82 = por %p80, %p81
    %p83 = scmp.ne.s32.totalorder %s74, %s75
    %p84 = scmp.eq.s32.totalorder %s17, 0
    %p85 = por %p83, %p84
    %p86 = scmp.ne.s32.totalorder %s74, %s75
    %p87 = scmp.eq.s32.totalorder %s18, 1
    %p88 = por %p86, %p87
    %p90 = scmp.ne.s32.totalorder %s75, %s89
    %p91 = scmp.eq.s32.totalorder %s18, 0
    %p92 = por %p90, %p91
    %s94 = sadd.s32 %s93, 1
    %p97 = scmp.eq.s32.totalorder %s12, 1
    %p98 = scmp.ne.s32.totalorder %s93, %s95
    %p99 = scmp.eq.s32.totalorder %s12, 0
    %p100 = por %p98, %p99
    %p101 = scmp.ne.s32.totalorder %s93, %s95
    %p102 = scmp.eq.s32.totalorder %s17, 1
    %p103 = por %p101, %p102
    %p104 = scmp.ne.s32.totalorder %s95, %s96
    %p105 = scmp.eq.s32.totalorder %s17, 0
    %p106 = por %p104, %p105
    %p107 = scmp.ne.s32.totalorder %s95, %s96
    %p108 = scmp.eq.s32.totalorder %s18, 1
    %p109 = por %p107, %p108
    %p111 = scmp.ne.s32.totalorder %s96, %s110
    %p112 = scmp.eq.s32.totalorder %s18, 0
    %p113 = por %p111, %p112
    %s115 = sadd.s32 %s114, 1
    %p118 = scmp.eq.s32.totalorder %s12, 1
    %p119 = scmp.ne.s32.totalorder %s114, %s116
    %p120 = scmp.eq.s32.totalorder %s12, 0
    %p121 = por %p119, %p120
    %p122 = scmp.ne.s32.totalorder %s114, %s116
    %p123 = scmp.eq.s32.totalorder %s17, 1
    %p124 = por %p122, %p123
    %p125 = scmp.ne.s32.totalorder %s116, %s117
    %p126 = scmp.eq.s32.totalorder %s17, 0
    %p127 = por %p125, %p126
    %p128 = scmp.ne.s32.totalorder %s116, %s117
    %p129 = scmp.eq.s32.totalorder %s18, 1
    %p130 = por %p128, %p129
    %p132 = scmp.ne.s32.totalorder %s117, %s131
    %p133 = scmp.eq.s32.totalorder %s18, 0
    %p134 = por %p132, %p133
    %s136 = sadd.s32 %s135, 1
    %p139 = scmp.eq.s32.totalorder %s12, 1
    %p140 = scmp.ne.s32.totalorder %s135, %s137
    %p141 = scmp.eq.s32.totalorder %s12, 0
    %p142 = por %p140, %p141
    %p143 = scmp.ne.s32.totalorder %s135, %s137
    %p144 = scmp.eq.s32.totalorder %s17, 1
    %p145 = por %p143, %p144
    %p146 = scmp.ne.s32.totalorder %s137, %s138
    %p147 = scmp.eq.s32.totalorder %s17, 0
    %p148 = por %p146, %p147
    %p149 = scmp.ne.s32.totalorder %s137, %s138
    %p150 = scmp.eq.s32.totalorder %s18, 1
    %p151 = por %p149, %p150
    %p153 = scmp.ne.s32.totalorder %s138, %s152
    %p154 = scmp.eq.s32.totalorder %s18, 0
    %p155 = por %p153, %p154
    %s156 = ssub.s32 %s12, %s19
    %p157 = scmp.eq.s32.totalorder %s156, 0
    %s159 = sadd.s32 %s158, 1
    %s160 = scalar_select %p157, %s158, %s159
    %p163 = pneg %p157
    %p164 = scmp.eq.s32.totalorder %s12, 1
    %p165 = por %p163, %p164
    %p166 = scmp.ne.s32.totalorder %s158, %s161
    %p167 = scmp.eq.s32.totalorder %s12, 0
    %p168 = por %p166, %p167
    %p169 = scmp.ne.s32.totalorder %s158, %s161
    %p170 = scmp.eq.s32.totalorder %s17, 1
    %p171 = por %p169, %p170
    %p172 = scmp.ne.s32.totalorder %s161, %s162
    %p173 = scmp.eq.s32.totalorder %s17, 0
    %p174 = por %p172, %p173
    %p175 = scmp.ne.s32.totalorder %s161, %s162
    %p176 = scmp.eq.s32.totalorder %s18, 1
    %p177 = por %p175, %p176
    %p179 = scmp.ne.s32.totalorder %s162, %s178
    %p180 = scmp.eq.s32.totalorder %s18, 0
    %p181 = por %p179, %p180
    %p182 = scmp.le.s32.totalorder 1, %s12
    %p183 = scmp.lt.s32.totalorder %s12, 3
    %p184 = pnand %p182, %p183
    %p185 = pneg %p184
    // Predicated region
    $region9: #{bbox_sam_forward.3} parent=5 // pred_check
      _
    $region10: #{bbox_sam_forward.3} parent=5 // pred_check_branch
      %187 = sbr.rel (%p184) target = $region12
    $region11: #{bbox_sam_forward.3} parent=5 // pred_region
      %s188 = ssub.s32 %s12, 1
      // Predicated region
      $region13: #{bbox_sam_forward.3} parent=11 // pred_check
        %p189 = pneg %p85
      $region14: #{bbox_sam_forward.3} parent=11 // pred_check_branch
        %191 = sbr.rel (%p189) target = $region16
      $region15: #{bbox_sam_forward.3} parent=11 // pred_region
        _
      $region16: #{bbox_sam_forward.3} parent=11 // pred_fallthru
        _
      // Predicated region
      $region17: #{bbox_sam_forward.3} parent=11 // pred_check
        %p192 = pneg %p106
      $region18: #{bbox_sam_forward.3} parent=11 // pred_check_branch
        %194 = sbr.rel (%p192) target = $region20
      $region19: #{bbox_sam_forward.3} parent=11 // pred_region
        _
      $region20: #{bbox_sam_forward.3} parent=11 // pred_fallthru
        _
      // Predicated region
      $region21: #{bbox_sam_forward.3} parent=11 // pred_check
        %p195 = pneg %p127
      $region22: #{bbox_sam_forward.3} parent=11 // pred_check_branch
        %197 = sbr.rel (%p195) target = $region24
      $region23: #{bbox_sam_forward.3} parent=11 // pred_region
        _
      $region24: #{bbox_sam_forward.3} parent=11 // pred_fallthru
        _
      // Predicated region
      $region25: #{bbox_sam_forward.3} parent=11 // pred_check
        %p198 = pneg %p148
      $region26: #{bbox_sam_forward.3} parent=11 // pred_check_branch
        %200 = sbr.rel (%p198) target = $region28
      $region27: #{bbox_sam_forward.3} parent=11 // pred_region
        _
      $region28: #{bbox_sam_forward.3} parent=11 // pred_fallthru
        _
    $region12: #{bbox_sam_forward.3} parent=5 // pred_fallthru
      _
    %p201 = scmp.lt.s32.totalorder %s12, 2
    // Predicated region
    $region29: #{bbox_sam_forward.3} parent=5 // pred_check
      %p202 = pneg %p201
    $region30: #{bbox_sam_forward.3} parent=5 // pred_check_branch
      %204 = sbr.rel (%p202) target = $region32
    $region31: #{bbox_sam_forward.3} parent=5 // pred_region
      // Predicated region
      $region33: #{bbox_sam_forward.3} parent=31 // pred_check
        %p205 = pneg %p32
      $region34: #{bbox_sam_forward.3} parent=31 // pred_check_branch
        %207 = sbr.rel (%p205) target = $region36
      $region35: #{bbox_sam_forward.3} parent=31 // pred_region
        %p208 = scmp.lt.s32.totalorder %s12, 1
        %s209 = scalar_select %p208, %s12, 1
        %s210 = smul.addr %s209, 2
        %s211 = smul.addr %s210, 4
        %s212 = scalar_lea.vmem %s0, %s211
      $region36: #{bbox_sam_forward.3} parent=31 // pred_fallthru
        _
      // Predicated region
      $region37: #{bbox_sam_forward.3} parent=31 // pred_check
        %p213 = pneg %p58
      $region38: #{bbox_sam_forward.3} parent=31 // pred_check_branch
        %215 = sbr.rel (%p213) target = $region40
      $region39: #{bbox_sam_forward.3} parent=31 // pred_region
        %p216 = scmp.lt.s32.totalorder %s12, 1
        %s217 = scalar_select %p216, %s12, 1
        %s218 = smul.addr %s217, 4
        %s219 = smul.addr %s218, 4
        %s220 = scalar_lea.vmem %s1, %s219
      $region40: #{bbox_sam_forward.3} parent=31 // pred_fallthru
        _
    $region32: #{bbox_sam_forward.3} parent=5 // pred_fallthru
      _
    %p221 = scmp.le.s32.totalorder 1, %s12
    %p222 = scmp.lt.s32.totalorder %s12, 3
    %p223 = pnand %p221, %p222
    %p224 = pneg %p223
    // Predicated region
    $region41: #{bbox_sam_forward.3} parent=5 // pred_check
      _
    $region42: #{bbox_sam_forward.3} parent=5 // pred_check_branch
      %226 = sbr.rel (%p223) target = $region44
    $region43: #{bbox_sam_forward.3} parent=5 // pred_region
      %s227 = ssub.s32 %s12, 1
      %p228 = scmp.lt.s32.totalorder %s17, 1
      %s229 = scalar_select %p228, %s17, 1
      %s230 = smul.addr %s229, 2
      %s231 = smul.addr %s230, 4
      %s232 = scalar_lea.vmem %s0, %s231
      %p233 = pneg %p38
      %p234 = pneg %p35
      %p235 = scmp.lt.s32.totalorder %s17, 1
      %s236 = scalar_select %p235, %s17, 1
      %s237 = smul.addr %s236, 4
      %s238 = smul.addr %s237, 4
      %s239 = scalar_lea.vmem %s1, %s238
      %p240 = pneg %p64
      %p241 = pneg %p61
      %p242 = pneg %p85
      %p243 = pneg %p82
      %p244 = pneg %p106
      %p245 = pneg %p103
      %p246 = pneg %p127
      %p247 = pneg %p124
      %p248 = pneg %p148
      %p249 = pneg %p145
      %p250 = pneg %p174
      %p251 = pneg %p171
      %p252 = scmp.lt.s32.totalorder %s17, 1
      %s253 = scalar_select %p252, %s17, 1
      %s254 = scalar_lea.vmem %s6, %s253
      %p255 = scmp.lt.s32.totalorder %s17, 1
      %s256 = scalar_select %p255, %s17, 1
      %s257 = smul.addr %s256, 2
      %s258 = smul.addr %s257, 4
      %s259 = scalar_lea.vmem %s0, %s258
      %p260 = scmp.lt.s32.totalorder %s17, 1
      %s261 = scalar_select %p260, %s17, 1
      %s262 = smul.addr %s261, 4
      %s263 = smul.addr %s262, 4
      %s264 = scalar_lea.vmem %s1, %s263
      %p265 = scmp.lt.s32.totalorder %s17, 1
      %s266 = scalar_select %p265, %s17, 1
      %s267 = scalar_lea.vmem %s6, %s266
      %v269 = vld [vmem:[%s259] sm:$0xff]
      %v270 = vld [vmem:[%s264] sm:$0xff]
      %v271 = vld [vmem:[%s264 + $0x8] sm:$0xff]
      %v272 = vld [vmem:[%s3] sm:$0xff]
      %v273 = vld [vmem:[%s3 + $0x8] sm:$0xff]
      %v274 = vld [vmem:[%s3 + $0x10] sm:$0xff]
      %v275 = vld [vmem:[%s3 + $0x18] sm:$0xff]
      %v276 = vld [vmem:[%s3 + $0x20] sm:$0xff]
      %v277 = vld [vmem:[%s3 + $0x28] sm:$0xff]
      %v278 = vld [vmem:[%s3 + $0x30] sm:$0xff]
      %v279 = vld [vmem:[%s3 + $0x38] sm:$0xff]
      %v280 = vld [vmem:[%s3 + $0x40] sm:$0xff]
      %v281 = vld [vmem:[%s3 + $0x48] sm:$0xff]
      %v282 = vld [vmem:[%s3 + $0x50] sm:$0xff]
      %v283 = vld [vmem:[%s3 + $0x58] sm:$0xff]
      %v284 = vld [vmem:[%s3 + $0x60] sm:$0xff]
      %v285 = vld [vmem:[%s3 + $0x68] sm:$0xff]
      %v286 = vld [vmem:[%s3 + $0x70] sm:$0xff]
      %v287 = vld [vmem:[%s3 + $0x78] sm:$0xff]
      %v288 = vld [vmem:[%s3 + $0x80] sm:$0xff]
      %v289 = vld [vmem:[%s3 + $0x88] sm:$0xff]
      %v290 = vld [vmem:[%s3 + $0x90] sm:$0xff]
      %v291 = vld [vmem:[%s3 + $0x98] sm:$0xff]
      %v292 = vld [vmem:[%s3 + $0xa0] sm:$0xff]
      %v293 = vld [vmem:[%s3 + $0xa8] sm:$0xff]
      %v294 = vld [vmem:[%s3 + $0xb0] sm:$0xff]
      %v295 = vld [vmem:[%s3 + $0xb8] sm:$0xff]
      %v296 = vld [vmem:[%s3 + $0xc0] sm:$0xff]
      %v297 = vld [vmem:[%s3 + $0xc8] sm:$0xff]
      %v298 = vld [vmem:[%s3 + $0xd0] sm:$0xff]
      %v299 = vld [vmem:[%s3 + $0xd8] sm:$0xff]
      %v300 = vld [vmem:[%s3 + $0xe0] sm:$0xff]
      %v301 = vld [vmem:[%s3 + $0xe8] sm:$0xff]
      %v302 = vld [vmem:[%s3 + $0xf0] sm:$0xff]
      %v303 = vld [vmem:[%s3 + $0xf8] sm:$0xff]
      %v305 = vunpack.c.l.b16 %v269
      %v306 = vunpack.c.h.b16 %v269
      %v307 = vpack.c.b16 %v305, %v305
      %v308 = vpack.c.b16 %v306, %v306
      %v343 = vunpack.c.l.b16 %v272
      %v344 = vunpack.c.h.b16 %v272
      %v345 = vunpack.c.l.b16 %v273
      %v346 = vunpack.c.h.b16 %v273
      %v347 = vunpack.c.l.b16 %v274
      %v348 = vunpack.c.h.b16 %v274
      %v349 = vunpack.c.l.b16 %v275
      %v350 = vunpack.c.h.b16 %v275
      %v351 = vunpack.c.l.b16 %v276
      %v352 = vunpack.c.h.b16 %v276
      %v353 = vunpack.c.l.b16 %v277
      %v354 = vunpack.c.h.b16 %v277
      %v355 = vunpack.c.l.b16 %v278
      %v356 = vunpack.c.h.b16 %v278
      %v357 = vunpack.c.l.b16 %v279
      %v358 = vunpack.c.h.b16 %v279
      %v359 = vunpack.c.l.b16 %v280
      %v360 = vunpack.c.h.b16 %v280
      %v361 = vunpack.c.l.b16 %v281
      %v362 = vunpack.c.h.b16 %v281
      %v363 = vunpack.c.l.b16 %v282
      %v364 = vunpack.c.h.b16 %v282
      %v365 = vunpack.c.l.b16 %v283
      %v366 = vunpack.c.h.b16 %v283
      %v367 = vunpack.c.l.b16 %v284
      %v368 = vunpack.c.h.b16 %v284
      %v369 = vunpack.c.l.b16 %v285
      %v370 = vunpack.c.h.b16 %v285
      %v371 = vunpack.c.l.b16 %v286
      %v372 = vunpack.c.h.b16 %v286
      %v373 = vunpack.c.l.b16 %v287
      %v374 = vunpack.c.h.b16 %v287
      %v375 = vunpack.c.l.b16 %v288
      %v376 = vunpack.c.h.b16 %v288
      %v377 = vunpack.c.l.b16 %v289
      %v378 = vunpack.c.h.b16 %v289
      %v379 = vunpack.c.l.b16 %v290
      %v380 = vunpack.c.h.b16 %v290
      %v381 = vunpack.c.l.b16 %v291
      %v382 = vunpack.c.h.b16 %v291
      %v383 = vunpack.c.l.b16 %v292
      %v384 = vunpack.c.h.b16 %v292
      %v385 = vunpack.c.l.b16 %v293
      %v386 = vunpack.c.h.b16 %v293
      %v387 = vunpack.c.l.b16 %v294
      %v388 = vunpack.c.h.b16 %v294
      %v389 = vunpack.c.l.b16 %v295
      %v390 = vunpack.c.h.b16 %v295
      %v391 = vunpack.c.l.b16 %v296
      %v392 = vunpack.c.h.b16 %v296
      %v393 = vunpack.c.l.b16 %v297
      %v394 = vunpack.c.h.b16 %v297
      %v395 = vunpack.c.l.b16 %v298
      %v396 = vunpack.c.h.b16 %v298
      %v397 = vunpack.c.l.b16 %v299
      %v398 = vunpack.c.h.b16 %v299
      %v399 = vunpack.c.l.b16 %v300
      %v400 = vunpack.c.h.b16 %v300
      %v401 = vunpack.c.l.b16 %v301
      %v402 = vunpack.c.h.b16 %v301
      %v403 = vunpack.c.l.b16 %v302
      %v404 = vunpack.c.h.b16 %v302
      %v405 = vunpack.c.l.b16 %v303
      %v406 = vunpack.c.h.b16 %v303
      %v407 = vpack.c.b16 %v345, %v343
      %v408 = vpack.c.b16 %v346, %v344
      %v409 = vpack.c.b16 %v349, %v347
      %v410 = vpack.c.b16 %v350, %v348
      %v411 = vpack.c.b16 %v353, %v351
      %v412 = vpack.c.b16 %v354, %v352
      %v413 = vpack.c.b16 %v357, %v355
      %v414 = vpack.c.b16 %v358, %v356
      %v415 = vpack.c.b16 %v361, %v359
      %v416 = vpack.c.b16 %v362, %v360
      %v417 = vpack.c.b16 %v365, %v363
      %v418 = vpack.c.b16 %v366, %v364
      %v419 = vpack.c.b16 %v369, %v367
      %v420 = vpack.c.b16 %v370, %v368
      %v421 = vpack.c.b16 %v373, %v371
      %v422 = vpack.c.b16 %v374, %v372
      %v423 = vpack.c.b16 %v377, %v375
      %v424 = vpack.c.b16 %v378, %v376
      %v425 = vpack.c.b16 %v381, %v379
      %v426 = vpack.c.b16 %v382, %v380
      %v427 = vpack.c.b16 %v385, %v383
      %v428 = vpack.c.b16 %v386, %v384
      %v429 = vpack.c.b16 %v389, %v387
      %v430 = vpack.c.b16 %v390, %v388
      %v431 = vpack.c.b16 %v393, %v391
      %v432 = vpack.c.b16 %v394, %v392
      %v433 = vpack.c.b16 %v397, %v395
      %v434 = vpack.c.b16 %v398, %v396
      %v435 = vpack.c.b16 %v401, %v399
      %v436 = vpack.c.b16 %v402, %v400
      %v437 = vpack.c.b16 %v405, %v403
      %v438 = vpack.c.b16 %v406, %v404
      %471 = vmatprep.subr.bf16.mxu0 %v408
      %472 = vmatpush1.bf16.msra.mxu0 %v407
      %473 = vmatprep.subr.bf16.mxu0 %v410
      %474 = vmatpush1.bf16.msra.mxu0 %v409
      %475 = vmatprep.subr.bf16.mxu0 %v412
      %476 = vmatpush1.bf16.msra.mxu0 %v411
      %477 = vmatprep.subr.bf16.mxu0 %v414
      %478 = vmatpush1.bf16.msra.mxu0 %v413
      %479 = vmatprep.subr.bf16.mxu0 %v416
      %480 = vmatpush1.bf16.msra.mxu0 %v415
      %481 = vmatprep.subr.bf16.mxu0 %v418
      %482 = vmatpush1.bf16.msra.mxu0 %v417
      %483 = vmatprep.subr.bf16.mxu0 %v420
      %484 = vmatpush1.bf16.msra.mxu0 %v419
      %485 = vmatprep.subr.bf16.mxu0 %v422
      %486 = vmatpush1.bf16.msra.mxu0 %v421
      %487 = vmatprep.subr.bf16.mxu0 %v424
      %488 = vmatpush1.bf16.msra.mxu0 %v423
      %489 = vmatprep.subr.bf16.mxu0 %v426
      %490 = vmatpush1.bf16.msra.mxu0 %v425
      %491 = vmatprep.subr.bf16.mxu0 %v428
      %492 = vmatpush1.bf16.msra.mxu0 %v427
      %493 = vmatprep.subr.bf16.mxu0 %v430
      %494 = vmatpush1.bf16.msra.mxu0 %v429
      %495 = vmatprep.subr.bf16.mxu0 %v432
      %496 = vmatpush1.bf16.msra.mxu0 %v431
      %497 = vmatprep.subr.bf16.mxu0 %v434
      %498 = vmatpush1.bf16.msra.mxu0 %v433
      %499 = vmatprep.subr.bf16.mxu0 %v436
      %500 = vmatpush1.bf16.msra.mxu0 %v435
      %501 = vmatprep.subr.bf16.mxu0 %v438
      %502 = vmatpush1.bf16.msra.mxu0 %v437
      %503 = vmatprep.mubr.bf16.mxu0 %v308
      %504 = vmatmul.mubr.bf16.gmra.mrb[0].mxu0 %v307
      %v505 = vpop.f32.mrb[0].mxu0
      %v506 = vadd.f32 0.0, %v505
      %v507 = vpop.f32.mrb[0].mxu0
      %v508 = vadd.f32 0.0, %v507
      %v509 = vpop.f32.mrb[0].mxu0
      %v510 = vpop.f32.mrb[0].mxu0
      %511 = vdwg.mxu0
      %v512 = vld [vmem:[%s4] sm:$0xff]
      %v513 = vld [vmem:[%s4 + $0x8] sm:$0xff]
      %v514 = vld [vmem:[%s4 + $0x10] sm:$0xff]
      %v515 = vld [vmem:[%s4 + $0x18] sm:$0xff]
      %v516 = vld [vmem:[%s4 + $0x20] sm:$0xff]
      %v517 = vld [vmem:[%s4 + $0x28] sm:$0xff]
      %v518 = vld [vmem:[%s4 + $0x30] sm:$0xff]
      %v519 = vld [vmem:[%s4 + $0x38] sm:$0xff]
      %v520 = vld [vmem:[%s4 + $0x40] sm:$0xff]
      %v521 = vld [vmem:[%s4 + $0x48] sm:$0xff]
      %v522 = vld [vmem:[%s4 + $0x50] sm:$0xff]
      %v523 = vld [vmem:[%s4 + $0x58] sm:$0xff]
      %v524 = vld [vmem:[%s4 + $0x60] sm:$0xff]
      %v525 = vld [vmem:[%s4 + $0x68] sm:$0xff]
      %v526 = vld [vmem:[%s4 + $0x70] sm:$0xff]
      %v527 = vld [vmem:[%s4 + $0x78] sm:$0xff]
      %v528 = vld [vmem:[%s4 + $0x80] sm:$0xff]
      %v529 = vld [vmem:[%s4 + $0x88] sm:$0xff]
      %v530 = vld [vmem:[%s4 + $0x90] sm:$0xff]
      %v531 = vld [vmem:[%s4 + $0x98] sm:$0xff]
      %v532 = vld [vmem:[%s4 + $0xa0] sm:$0xff]
      %v533 = vld [vmem:[%s4 + $0xa8] sm:$0xff]
      %v534 = vld [vmem:[%s4 + $0xb0] sm:$0xff]
      %v535 = vld [vmem:[%s4 + $0xb8] sm:$0xff]
      %v536 = vld [vmem:[%s4 + $0xc0] sm:$0xff]
      %v537 = vld [vmem:[%s4 + $0xc8] sm:$0xff]
      %v538 = vld [vmem:[%s4 + $0xd0] sm:$0xff]
      %v539 = vld [vmem:[%s4 + $0xd8] sm:$0xff]
      %v540 = vld [vmem:[%s4 + $0xe0] sm:$0xff]
      %v541 = vld [vmem:[%s4 + $0xe8] sm:$0xff]
      %v542 = vld [vmem:[%s4 + $0xf0] sm:$0xff]
      %v543 = vld [vmem:[%s4 + $0xf8] sm:$0xff]
      %v544 = vld [vmem:[%s4 + $0x100] sm:$0xff]
      %v545 = vld [vmem:[%s4 + $0x108] sm:$0xff]
      %v546 = vld [vmem:[%s4 + $0x110] sm:$0xff]
      %v547 = vld [vmem:[%s4 + $0x118] sm:$0xff]
      %v548 = vld [vmem:[%s4 + $0x120] sm:$0xff]
      %v549 = vld [vmem:[%s4 + $0x128] sm:$0xff]
      %v550 = vld [vmem:[%s4 + $0x130] sm:$0xff]
      %v551 = vld [vmem:[%s4 + $0x138] sm:$0xff]
      %v552 = vld [vmem:[%s4 + $0x140] sm:$0xff]
      %v553 = vld [vmem:[%s4 + $0x148] sm:$0xff]
      %v554 = vld [vmem:[%s4 + $0x150] sm:$0xff]
      %v555 = vld [vmem:[%s4 + $0x158] sm:$0xff]
      %v556 = vld [vmem:[%s4 + $0x160] sm:$0xff]
      %v557 = vld [vmem:[%s4 + $0x168] sm:$0xff]
      %v558 = vld [vmem:[%s4 + $0x170] sm:$0xff]
      %v559 = vld [vmem:[%s4 + $0x178] sm:$0xff]
      %v560 = vld [vmem:[%s4 + $0x180] sm:$0xff]
      %v561 = vld [vmem:[%s4 + $0x188] sm:$0xff]
      %v562 = vld [vmem:[%s4 + $0x190] sm:$0xff]
      %v563 = vld [vmem:[%s4 + $0x198] sm:$0xff]
      %v564 = vld [vmem:[%s4 + $0x1a0] sm:$0xff]
      %v565 = vld [vmem:[%s4 + $0x1a8] sm:$0xff]
      %v566 = vld [vmem:[%s4 + $0x1b0] sm:$0xff]
      %v567 = vld [vmem:[%s4 + $0x1b8] sm:$0xff]
      %v568 = vld [vmem:[%s4 + $0x1c0] sm:$0xff]
      %v569 = vld [vmem:[%s4 + $0x1c8] sm:$0xff]
      %v570 = vld [vmem:[%s4 + $0x1d0] sm:$0xff]
      %v571 = vld [vmem:[%s4 + $0x1d8] sm:$0xff]
      %v572 = vld [vmem:[%s4 + $0x1e0] sm:$0xff]
      %v573 = vld [vmem:[%s4 + $0x1e8] sm:$0xff]
      %v574 = vld [vmem:[%s4 + $0x1f0] sm:$0xff]
      %v575 = vld [vmem:[%s4 + $0x1f8] sm:$0xff]
      %v578 = vunpack.c.l.b16 %v270
      %v579 = vunpack.c.h.b16 %v270
      %v580 = vunpack.c.l.b16 %v271
      %v581 = vunpack.c.h.b16 %v271
      %v582 = vpack.c.b16 %v580, %v578
      %v583 = vpack.c.b16 %v581, %v579
      %v650 = vunpack.c.l.b16 %v512
      %v651 = vunpack.c.h.b16 %v512
      %v652 = vunpack.c.l.b16 %v513
      %v653 = vunpack.c.h.b16 %v513
      %v654 = vunpack.c.l.b16 %v514
      %v655 = vunpack.c.h.b16 %v514
      %v656 = vunpack.c.l.b16 %v515
      %v657 = vunpack.c.h.b16 %v515
      %v658 = vunpack.c.l.b16 %v516
      %v659 = vunpack.c.h.b16 %v516
      %v660 = vunpack.c.l.b16 %v517
      %v661 = vunpack.c.h.b16 %v517
      %v662 = vunpack.c.l.b16 %v518
      %v663 = vunpack.c.h.b16 %v518
      %v664 = vunpack.c.l.b16 %v519
      %v665 = vunpack.c.h.b16 %v519
      %v666 = vunpack.c.l.b16 %v520
      %v667 = vunpack.c.h.b16 %v520
      %v668 = vunpack.c.l.b16 %v521
      %v669 = vunpack.c.h.b16 %v521
      %v670 = vunpack.c.l.b16 %v522
      %v671 = vunpack.c.h.b16 %v522
      %v672 = vunpack.c.l.b16 %v523
      %v673 = vunpack.c.h.b16 %v523
      %v674 = vunpack.c.l.b16 %v524
      %v675 = vunpack.c.h.b16 %v524
      %v676 = vunpack.c.l.b16 %v525
      %v677 = vunpack.c.h.b16 %v525
      %v678 = vunpack.c.l.b16 %v526
      %v679 = vunpack.c.h.b16 %v526
      %v680 = vunpack.c.l.b16 %v527
      %v681 = vunpack.c.h.b16 %v527
      %v682 = vunpack.c.l.b16 %v528
      %v683 = vunpack.c.h.b16 %v528
      %v684 = vunpack.c.l.b16 %v529
      %v685 = vunpack.c.h.b16 %v529
      %v686 = vunpack.c.l.b16 %v530
      %v687 = vunpack.c.h.b16 %v530
      %v688 = vunpack.c.l.b16 %v531
      %v689 = vunpack.c.h.b16 %v531
      %v690 = vunpack.c.l.b16 %v532
      %v691 = vunpack.c.h.b16 %v532
      %v692 = vunpack.c.l.b16 %v533
      %v693 = vunpack.c.h.b16 %v533
      %v694 = vunpack.c.l.b16 %v534
      %v695 = vunpack.c.h.b16 %v534
      %v696 = vunpack.c.l.b16 %v535
      %v697 = vunpack.c.h.b16 %v535
      %v698 = vunpack.c.l.b16 %v536
      %v699 = vunpack.c.h.b16 %v536
      %v700 = vunpack.c.l.b16 %v537
      %v701 = vunpack.c.h.b16 %v537
      %v702 = vunpack.c.l.b16 %v538
      %v703 = vunpack.c.h.b16 %v538
      %v704 = vunpack.c.l.b16 %v539
      %v705 = vunpack.c.h.b16 %v539
      %v706 = vunpack.c.l.b16 %v540
      %v707 = vunpack.c.h.b16 %v540
      %v708 = vunpack.c.l.b16 %v541
      %v709 = vunpack.c.h.b16 %v541
      %v710 = vunpack.c.l.b16 %v542
      %v711 = vunpack.c.h.b16 %v542
      %v712 = vunpack.c.l.b16 %v543
      %v713 = vunpack.c.h.b16 %v543
      %v714 = vunpack.c.l.b16 %v544
      %v715 = vunpack.c.h.b16 %v544
      %v716 = vunpack.c.l.b16 %v545
      %v717 = vunpack.c.h.b16 %v545
      %v718 = vunpack.c.l.b16 %v546
      %v719 = vunpack.c.h.b16 %v546
      %v720 = vunpack.c.l.b16 %v547
      %v721 = vunpack.c.h.b16 %v547
      %v722 = vunpack.c.l.b16 %v548
      %v723 = vunpack.c.h.b16 %v548
      %v724 = vunpack.c.l.b16 %v549
      %v725 = vunpack.c.h.b16 %v549
      %v726 = vunpack.c.l.b16 %v550
      %v727 = vunpack.c.h.b16 %v550
      %v728 = vunpack.c.l.b16 %v551
      %v729 = vunpack.c.h.b16 %v551
      %v730 = vunpack.c.l.b16 %v552
      %v731 = vunpack.c.h.b16 %v552
      %v732 = vunpack.c.l.b16 %v553
      %v733 = vunpack.c.h.b16 %v553
      %v734 = vunpack.c.l.b16 %v554
      %v735 = vunpack.c.h.b16 %v554
      %v736 = vunpack.c.l.b16 %v555
      %v737 = vunpack.c.h.b16 %v555
      %v738 = vunpack.c.l.b16 %v556
      %v739 = vunpack.c.h.b16 %v556
      %v740 = vunpack.c.l.b16 %v557
      %v741 = vunpack.c.h.b16 %v557
      %v742 = vunpack.c.l.b16 %v558
      %v743 = vunpack.c.h.b16 %v558
      %v744 = vunpack.c.l.b16 %v559
      %v745 = vunpack.c.h.b16 %v559
      %v746 = vunpack.c.l.b16 %v560
      %v747 = vunpack.c.h.b16 %v560
      %v748 = vunpack.c.l.b16 %v561
      %v749 = vunpack.c.h.b16 %v561
      %v750 = vunpack.c.l.b16 %v562
      %v751 = vunpack.c.h.b16 %v562
      %v752 = vunpack.c.l.b16 %v563
      %v753 = vunpack.c.h.b16 %v563
      %v754 = vunpack.c.l.b16 %v564
      %v755 = vunpack.c.h.b16 %v564
      %v756 = vunpack.c.l.b16 %v565
      %v757 = vunpack.c.h.b16 %v565
      %v758 = vunpack.c.l.b16 %v566
      %v759 = vunpack.c.h.b16 %v566
      %v760 = vunpack.c.l.b16 %v567
      %v761 = vunpack.c.h.b16 %v567
      %v762 = vunpack.c.l.b16 %v568
      %v763 = vunpack.c.h.b16 %v568
      %v764 = vunpack.c.l.b16 %v569
      %v765 = vunpack.c.h.b16 %v569
      %v766 = vunpack.c.l.b16 %v570
      %v767 = vunpack.c.h.b16 %v570
      %v768 = vunpack.c.l.b16 %v571
      %v769 = vunpack.c.h.b16 %v571
      %v770 = vunpack.c.l.b16 %v572
      %v771 = vunpack.c.h.b16 %v572
      %v772 = vunpack.c.l.b16 %v573
      %v773 = vunpack.c.h.b16 %v573
      %v774 = vunpack.c.l.b16 %v574
      %v775 = vunpack.c.h.b16 %v574
      %v776 = vunpack.c.l.b16 %v575
      %v777 = vunpack.c.h.b16 %v575
      %v778 = vpack.c.b16 %v654, %v650
      %v779 = vpack.c.b16 %v655, %v651
      %v780 = vpack.c.b16 %v656, %v652
      %v781 = vpack.c.b16 %v657, %v653
      %v782 = vpack.c.b16 %v662, %v658
      %v783 = vpack.c.b16 %v663, %v659
      %v784 = vpack.c.b16 %v664, %v660
      %v785 = vpack.c.b16 %v665, %v661
      %v786 = vpack.c.b16 %v670, %v666
      %v787 = vpack.c.b16 %v671, %v667
      %v788 = vpack.c.b16 %v672, %v668
      %v789 = vpack.c.b16 %v673, %v669
      %v790 = vpack.c.b16 %v678, %v674
      %v791 = vpack.c.b16 %v679, %v675
      %v792 = vpack.c.b16 %v680, %v676
      %v793 = vpack.c.b16 %v681, %v677
      %v794 = vpack.c.b16 %v686, %v682
      %v795 = vpack.c.b16 %v687, %v683
      %v796 = vpack.c.b16 %v688, %v684
      %v797 = vpack.c.b16 %v689, %v685
      %v798 = vpack.c.b16 %v694, %v690
      %v799 = vpack.c.b16 %v695, %v691
      %v800 = vpack.c.b16 %v696, %v692
      %v801 = vpack.c.b16 %v697, %v693
      %v802 = vpack.c.b16 %v702, %v698
      %v803 = vpack.c.b16 %v703, %v699
      %v804 = vpack.c.b16 %v704, %v700
      %v805 = vpack.c.b16 %v705, %v701
      %v806 = vpack.c.b16 %v710, %v706
      %v807 = vpack.c.b16 %v711, %v707
      %v808 = vpack.c.b16 %v712, %v708
      %v809 = vpack.c.b16 %v713, %v709
      %v810 = vpack.c.b16 %v718, %v714
      %v811 = vpack.c.b16 %v719, %v715
      %v812 = vpack.c.b16 %v720, %v716
      %v813 = vpack.c.b16 %v721, %v717
      %v814 = vpack.c.b16 %v726, %v722
      %v815 = vpack.c.b16 %v727, %v723
      %v816 = vpack.c.b16 %v728, %v724
      %v817 = vpack.c.b16 %v729, %v725
      %v818 = vpack.c.b16 %v734, %v730
      %v819 = vpack.c.b16 %v735, %v731
      %v820 = vpack.c.b16 %v736, %v732
      %v821 = vpack.c.b16 %v737, %v733
      %v822 = vpack.c.b16 %v742, %v738
      %v823 = vpack.c.b16 %v743, %v739
      %v824 = vpack.c.b16 %v744, %v740
      %v825 = vpack.c.b16 %v745, %v741
      %v826 = vpack.c.b16 %v750, %v746
      %v827 = vpack.c.b16 %v751, %v747
      %v828 = vpack.c.b16 %v752, %v748
      %v829 = vpack.c.b16 %v753, %v749
      %v830 = vpack.c.b16 %v758, %v754
      %v831 = vpack.c.b16 %v759, %v755
      %v832 = vpack.c.b16 %v760, %v756
      %v833 = vpack.c.b16 %v761, %v757
      %v834 = vpack.c.b16 %v766, %v762
      %v835 = vpack.c.b16 %v767, %v763
      %v836 = vpack.c.b16 %v768, %v764
      %v837 = vpack.c.b16 %v769, %v765
      %v838 = vpack.c.b16 %v774, %v770
      %v839 = vpack.c.b16 %v775, %v771
      %v840 = vpack.c.b16 %v776, %v772
      %v841 = vpack.c.b16 %v777, %v773
      %906 = vmatprep.subr.bf16.mxu0 %v779
      %907 = vmatpush1.bf16.msra.mxu0 %v778
      %908 = vmatprep.subr.bf16.mxu0 %v783
      %909 = vmatpush1.bf16.msra.mxu0 %v782
      %910 = vmatprep.subr.bf16.mxu0 %v787
      %911 = vmatpush1.bf16.msra.mxu0 %v786
      %912 = vmatprep.subr.bf16.mxu0 %v791
      %913 = vmatpush1.bf16.msra.mxu0 %v790
      %914 = vmatprep.subr.bf16.mxu0 %v795
      %915 = vmatpush1.bf16.msra.mxu0 %v794
      %916 = vmatprep.subr.bf16.mxu0 %v799
      %917 = vmatpush1.bf16.msra.mxu0 %v798
      %918 = vmatprep.subr.bf16.mxu0 %v803
      %919 = vmatpush1.bf16.msra.mxu0 %v802
      %920 = vmatprep.subr.bf16.mxu0 %v807
      %921 = vmatpush1.bf16.msra.mxu0 %v806
      %922 = vmatprep.subr.bf16.mxu0 %v811
      %923 = vmatpush1.bf16.msra.mxu0 %v810
      %924 = vmatprep.subr.bf16.mxu0 %v815
      %925 = vmatpush1.bf16.msra.mxu0 %v814
      %926 = vmatprep.subr.bf16.mxu0 %v819
      %927 = vmatpush1.bf16.msra.mxu0 %v818
      %928 = vmatprep.subr.bf16.mxu0 %v823
      %929 = vmatpush1.bf16.msra.mxu0 %v822
      %930 = vmatprep.subr.bf16.mxu0 %v827
      %931 = vmatpush1.bf16.msra.mxu0 %v826
      %932 = vmatprep.subr.bf16.mxu0 %v831
      %933 = vmatpush1.bf16.msra.mxu0 %v830
      %934 = vmatprep.subr.bf16.mxu0 %v835
      %935 = vmatpush1.bf16.msra.mxu0 %v834
      %936 = vmatprep.subr.bf16.mxu0 %v839
      %937 = vmatpush1.bf16.msra.mxu0 %v838
      %938 = vmatprep.mubr.bf16.mxu0 %v583
      %939 = vmatmul.mubr.bf16.gmra.mrb[0].mxu0 %v582
      %v940 = vpop.f32.mrb[0].mxu0
      %v941 = vadd.f32 0.0, %v940
      %v942 = vpop.f32.mrb[0].mxu0
      %v943 = vadd.f32 0.0, %v942
      %v944 = vpop.f32.mrb[0].mxu0
      %v945 = vadd.f32 0.0, %v944
      %v946 = vpop.f32.mrb[0].mxu0
      %v947 = vadd.f32 0.0, %v946
      %948 = vdwg.mxu0
      %949 = vmatprep.subr.bf16.mxu0 %v781
      %950 = vmatpush1.bf16.msra.mxu0 %v780
      %951 = vmatprep.subr.bf16.mxu0 %v785
      %952 = vmatpush1.bf16.msra.mxu0 %v784
      %953 = vmatprep.subr.bf16.mxu0 %v789
      %954 = vmatpush1.bf16.msra.mxu0 %v788
      %955 = vmatprep.subr.bf16.mxu0 %v793
      %956 = vmatpush1.bf16.msra.mxu0 %v792
      %957 = vmatprep.subr.bf16.mxu0 %v797
      %958 = vmatpush1.bf16.msra.mxu0 %v796
      %959 = vmatprep.subr.bf16.mxu0 %v801
      %960 = vmatpush1.bf16.msra.mxu0 %v800
      %961 = vmatprep.subr.bf16.mxu0 %v805
      %962 = vmatpush1.bf16.msra.mxu0 %v804
      %963 = vmatprep.subr.bf16.mxu0 %v809
      %964 = vmatpush1.bf16.msra.mxu0 %v808
      %965 = vmatprep.subr.bf16.mxu0 %v813
      %966 = vmatpush1.bf16.msra.mxu0 %v812
      %967 = vmatprep.subr.bf16.mxu0 %v817
      %968 = vmatpush1.bf16.msra.mxu0 %v816
      %969 = vmatprep.subr.bf16.mxu0 %v821
      %970 = vmatpush1.bf16.msra.mxu0 %v820
      %971 = vmatprep.subr.bf16.mxu0 %v825
      %972 = vmatpush1.bf16.msra.mxu0 %v824
      %973 = vmatprep.subr.bf16.mxu0 %v829
      %974 = vmatpush1.bf16.msra.mxu0 %v828
      %975 = vmatprep.subr.bf16.mxu0 %v833
      %976 = vmatpush1.bf16.msra.mxu0 %v832
      %977 = vmatprep.subr.bf16.mxu0 %v837
      %978 = vmatpush1.bf16.msra.mxu0 %v836
      %979 = vmatprep.subr.bf16.mxu0 %v841
      %980 = vmatpush1.bf16.msra.mxu0 %v840
      %981 = vmatprep.mubr.bf16.mxu0 %v583
      %982 = vmatmul.mubr.bf16.gmra.mrb[0].mxu0 %v582
      %v983 = vpop.f32.mrb[0].mxu0
      %v984 = vadd.f32 0.0, %v983
      %v985 = vpop.f32.mrb[0].mxu0
      %v986 = vadd.f32 0.0, %v985
      %v987 = vpop.f32.mrb[0].mxu0
      %v988 = vadd.f32 0.0, %v987
      %v989 = vpop.f32.mrb[0].mxu0
      %v990 = vadd.f32 0.0, %v989
      %991 = vdwg.mxu0
      %v992 = vld [vmem:[%s2] sm:$0xff]
      %v993 = vld [vmem:[%s2 + $0x8] sm:$0xff]
      %v994 = vld [vmem:[%s2 + $0x10] sm:$0xff]
      %v995 = vld [vmem:[%s2 + $0x18] sm:$0xff]
      %v996 = vadd.f32 %v941, %v992
      %v997 = vadd.f32 %v943, %v993
      %v998 = vadd.f32 %v945, %v994
      %v999 = vadd.f32 %v947, %v995
      %v1000 = vpack.c.bf16 %v998, %v996
      %v1001 = vpack.c.bf16 %v999, %v997
      %v1002 = vpack.c.bf16 %v988, %v984
      %v1003 = vpack.c.bf16 %v990, %v986
      %v1004 = vpack.c.bf16 %v506, %v506
      %v1005 = vpack.c.bf16 %v508, %v508
      %1006 = vmatprep.subr.bf16.mxu0 %v1001
      %1007 = vmatpush1.bf16.xpose.msra.mxu0 %v1000
      %1008 = vmatprep.subr.bf16.mxu0 0
      %1009 = vmatpush1.bf16.xpose.msra.mxu0 0
      %1010 = vmatprep.subr.bf16.mxu0 0
      %1011 = vmatpush1.bf16.xpose.msra.mxu0 0
      %1012 = vmatprep.subr.bf16.mxu0 0
      %1013 = vmatpush1.bf16.xpose.msra.mxu0 0
      %1014 = vmatprep.subr.bf16.mxu0 0
      %1015 = vmatpush1.bf16.xpose.msra.mxu0 0
      %1016 = vmatprep.subr.bf16.mxu0 0
      %1017 = vmatpush1.bf16.xpose.msra.mxu0 0
      %1018 = vmatprep.subr.bf16.mxu0 0
      %1019 = vmatpush1.bf16.xpose.msra.mxu0 0
      %1020 = vmatprep.subr.bf16.mxu0 0
      %1021 = vmatpush1.bf16.xpose.msra.mxu0 0
      %1022 = vmatprep.subr.bf16.mxu0 0
      %1023 = vmatpush1.bf16.xpose.msra.mxu0 0
      %1024 = vmatprep.subr.bf16.mxu0 0
      %1025 = vmatpush1.bf16.xpose.msra.mxu0 0
      %1026 = vmatprep.subr.bf16.mxu0 0
      %1027 = vmatpush1.bf16.xpose.msra.mxu0 0
      %1028 = vmatprep.subr.bf16.mxu0 0
      %1029 = vmatpush1.bf16.xpose.msra.mxu0 0
      %1030 = vmatprep.subr.bf16.mxu0 0
      %1031 = vmatpush1.bf16.xpose.msra.mxu0 0
      %1032 = vmatprep.subr.bf16.mxu0 0
      %1033 = vmatpush1.bf16.xpose.msra.mxu0 0
      %1034 = vmatprep.subr.bf16.mxu0 0
      %1035 = vmatpush1.bf16.xpose.msra.mxu0 0
      %1036 = vmatprep.subr.bf16.mxu0 0
      %1037 = vmatpush1.bf16.xpose.msra.mxu0 0
      %1038 = vmatprep.mubr.bf16.mxu0 %v1005
      %1039 = vmatmul.mubr.bf16.gmra.mrb[0].mxu0 %v1004
      %v1040 = vpop.f32.mrb[0].mxu0
      %v1041 = vadd.f32 0.0, %v1040
      %v1042 = vpop.f32.mrb[0].mxu0
      %v1043 = vpop.f32.mrb[0].mxu0
      %v1044 = vpop.f32.mrb[0].mxu0
      %1045 = vdwg.mxu0
      %v1046 = vmul.f32 %v1041, 0.0625
      %v1047 = vlaneseq
      %v1048 = vand.u32 %v1047, 127
      %vm1049 = vcmp.lt.s32.totalorder %v1048, 16
      %v1050 = vsel %vm1049, %v1046, -1e+30
      %vm1051 = vcmask 130048
      %v1052 = vsel %vm1051, %v1050, -inf
      %1053 = vmax.xlane.f32.xlu0 %v1052
      %v1054 = vpop.xlane.xlu0 %1053
      %v1055 = vsub.f32 %v1050, %v1054
      %v1056 = vmul.f32 %v1055, 1.442695
      %v1057 = vpow.pop %v1056
      %v1058 = vsel %vm1051, %v1057, 0.0
      %1059 = vadd.xlane.f32.xlu0 %v1058
      %v1060 = vpop.xlane.xlu0 %1059
      %v1061 = vrcp.pop %v1060
      %v1062 = vmul.f32 %v1057, %v1061
      %v1063 = vpack.c.bf16 %v1062, %v1062
      %v1065 = vsel %vm1051, %v1063, 0
      %1067 = vmatprep.subr.bf16.mxu0 %v1003
      %1068 = vmatpush1.bf16.msra.mxu0 %v1002
      %1069 = vmatprep.subr.bf16.mxu0 0
      %1070 = vmatpush1.bf16.msra.mxu0 0
      %1071 = vmatprep.subr.bf16.mxu0 0
      %1072 = vmatpush1.bf16.msra.mxu0 0
      %1073 = vmatprep.subr.bf16.mxu0 0
      %1074 = vmatpush1.bf16.msra.mxu0 0
      %1075 = vmatprep.subr.bf16.mxu0 0
      %1076 = vmatpush1.bf16.msra.mxu0 0
      %1077 = vmatprep.subr.bf16.mxu0 0
      %1078 = vmatpush1.bf16.msra.mxu0 0
      %1079 = vmatprep.subr.bf16.mxu0 0
      %1080 = vmatpush1.bf16.msra.mxu0 0
      %1081 = vmatprep.subr.bf16.mxu0 0
      %1082 = vmatpush1.bf16.msra.mxu0 0
      %1083 = vmatprep.subr.bf16.mxu0 0
      %1084 = vmatpush1.bf16.msra.mxu0 0
      %1085 = vmatprep.subr.bf16.mxu0 0
      %1086 = vmatpush1.bf16.msra.mxu0 0
      %1087 = vmatprep.subr.bf16.mxu0 0
      %1088 = vmatpush1.bf16.msra.mxu0 0
      %1089 = vmatprep.subr.bf16.mxu0 0
      %1090 = vmatpush1.bf16.msra.mxu0 0
      %1091 = vmatprep.subr.bf16.mxu0 0
      %1092 = vmatpush1.bf16.msra.mxu0 0
      %1093 = vmatprep.subr.bf16.mxu0 0
      %1094 = vmatpush1.bf16.msra.mxu0 0
      %1095 = vmatprep.subr.bf16.mxu0 0
      %1096 = vmatpush1.bf16.msra.mxu0 0
      %1097 = vmatprep.subr.bf16.mxu0 0
      %1098 = vmatpush1.bf16.msra.mxu0 0
      %1099 = vmatprep.mubr.bf16.mxu0 0
      %1100 = vmatmul.mubr.bf16.gmra.mrb[0].mxu0 %v1065
      %v1101 = vpop.f32.mrb[0].mxu0
      %v1102 = vadd.f32 0.0, %v1101
      %v1103 = vpop.f32.mrb[0].mxu0
      %v1104 = vadd.f32 0.0, %v1103
      %v1105 = vpop.f32.mrb[0].mxu0
      %v1106 = vpop.f32.mrb[0].mxu0
      %1107 = vdwg.mxu0
      %v1108 = vpack.c.bf16 %v1102, %v1102
      %v1109 = vpack.c.bf16 %v1104, %v1104
      %v1110 = vld [vmem:[%s5] sm:$0xff]
      %v1111 = vld [vmem:[%s5 + $0x8] sm:$0xff]
      %v1112 = vld [vmem:[%s5 + $0x10] sm:$0xff]
      %v1113 = vld [vmem:[%s5 + $0x18] sm:$0xff]
      %v1114 = vld [vmem:[%s5 + $0x20] sm:$0xff]
      %v1115 = vld [vmem:[%s5 + $0x28] sm:$0xff]
      %v1116 = vld [vmem:[%s5 + $0x30] sm:$0xff]
      %v1117 = vld [vmem:[%s5 + $0x38] sm:$0xff]
      %v1118 = vld [vmem:[%s5 + $0x40] sm:$0xff]
      %v1119 = vld [vmem:[%s5 + $0x48] sm:$0xff]
      %v1120 = vld [vmem:[%s5 + $0x50] sm:$0xff]
      %v1121 = vld [vmem:[%s5 + $0x58] sm:$0xff]
      %v1122 = vld [vmem:[%s5 + $0x60] sm:$0xff]
      %v1123 = vld [vmem:[%s5 + $0x68] sm:$0xff]
      %v1124 = vld [vmem:[%s5 + $0x70] sm:$0xff]
      %v1125 = vld [vmem:[%s5 + $0x78] sm:$0xff]
      %v1126 = vld [vmem:[%s5 + $0x80] sm:$0xff]
      %v1127 = vld [vmem:[%s5 + $0x88] sm:$0xff]
      %v1128 = vld [vmem:[%s5 + $0x90] sm:$0xff]
      %v1129 = vld [vmem:[%s5 + $0x98] sm:$0xff]
      %v1130 = vld [vmem:[%s5 + $0xa0] sm:$0xff]
      %v1131 = vld [vmem:[%s5 + $0xa8] sm:$0xff]
      %v1132 = vld [vmem:[%s5 + $0xb0] sm:$0xff]
      %v1133 = vld [vmem:[%s5 + $0xb8] sm:$0xff]
      %v1134 = vld [vmem:[%s5 + $0xc0] sm:$0xff]
      %v1135 = vld [vmem:[%s5 + $0xc8] sm:$0xff]
      %v1136 = vld [vmem:[%s5 + $0xd0] sm:$0xff]
      %v1137 = vld [vmem:[%s5 + $0xd8] sm:$0xff]
      %v1138 = vld [vmem:[%s5 + $0xe0] sm:$0xff]
      %v1139 = vld [vmem:[%s5 + $0xe8] sm:$0xff]
      %v1140 = vld [vmem:[%s5 + $0xf0] sm:$0xff]
      %v1141 = vld [vmem:[%s5 + $0xf8] sm:$0xff]
      %v1174 = vunpack.c.l.b16 %v1110
      %v1175 = vunpack.c.h.b16 %v1110
      %v1176 = vunpack.c.l.b16 %v1111
      %v1177 = vunpack.c.h.b16 %v1111
      %v1178 = vunpack.c.l.b16 %v1112
      %v1179 = vunpack.c.h.b16 %v1112
      %v1180 = vunpack.c.l.b16 %v1113
      %v1181 = vunpack.c.h.b16 %v1113
      %v1182 = vunpack.c.l.b16 %v1114
      %v1183 = vunpack.c.h.b16 %v1114
      %v1184 = vunpack.c.l.b16 %v1115
      %v1185 = vunpack.c.h.b16 %v1115
      %v1186 = vunpack.c.l.b16 %v1116
      %v1187 = vunpack.c.h.b16 %v1116
      %v1188 = vunpack.c.l.b16 %v1117
      %v1189 = vunpack.c.h.b16 %v1117
      %v1190 = vunpack.c.l.b16 %v1118
      %v1191 = vunpack.c.h.b16 %v1118
      %v1192 = vunpack.c.l.b16 %v1119
      %v1193 = vunpack.c.h.b16 %v1119
      %v1194 = vunpack.c.l.b16 %v1120
      %v1195 = vunpack.c.h.b16 %v1120
      %v1196 = vunpack.c.l.b16 %v1121
      %v1197 = vunpack.c.h.b16 %v1121
      %v1198 = vunpack.c.l.b16 %v1122
      %v1199 = vunpack.c.h.b16 %v1122
      %v1200 = vunpack.c.l.b16 %v1123
      %v1201 = vunpack.c.h.b16 %v1123
      %v1202 = vunpack.c.l.b16 %v1124
      %v1203 = vunpack.c.h.b16 %v1124
      %v1204 = vunpack.c.l.b16 %v1125
      %v1205 = vunpack.c.h.b16 %v1125
      %v1206 = vunpack.c.l.b16 %v1126
      %v1207 = vunpack.c.h.b16 %v1126
      %v1208 = vunpack.c.l.b16 %v1127
      %v1209 = vunpack.c.h.b16 %v1127
      %v1210 = vunpack.c.l.b16 %v1128
      %v1211 = vunpack.c.h.b16 %v1128
      %v1212 = vunpack.c.l.b16 %v1129
      %v1213 = vunpack.c.h.b16 %v1129
      %v1214 = vunpack.c.l.b16 %v1130
      %v1215 = vunpack.c.h.b16 %v1130
      %v1216 = vunpack.c.l.b16 %v1131
      %v1217 = vunpack.c.h.b16 %v1131
      %v1218 = vunpack.c.l.b16 %v1132
      %v1219 = vunpack.c.h.b16 %v1132
      %v1220 = vunpack.c.l.b16 %v1133
      %v1221 = vunpack.c.h.b16 %v1133
      %v1222 = vunpack.c.l.b16 %v1134
      %v1223 = vunpack.c.h.b16 %v1134
      %v1224 = vunpack.c.l.b16 %v1135
      %v1225 = vunpack.c.h.b16 %v1135
      %v1226 = vunpack.c.l.b16 %v1136
      %v1227 = vunpack.c.h.b16 %v1136
      %v1228 = vunpack.c.l.b16 %v1137
      %v1229 = vunpack.c.h.b16 %v1137
      %v1230 = vunpack.c.l.b16 %v1138
      %v1231 = vunpack.c.h.b16 %v1138
      %v1232 = vunpack.c.l.b16 %v1139
      %v1233 = vunpack.c.h.b16 %v1139
      %v1234 = vunpack.c.l.b16 %v1140
      %v1235 = vunpack.c.h.b16 %v1140
      %v1236 = vunpack.c.l.b16 %v1141
      %v1237 = vunpack.c.h.b16 %v1141
      %v1238 = vpack.c.b16 %v1176, %v1174
      %v1239 = vpack.c.b16 %v1177, %v1175
      %v1240 = vpack.c.b16 %v1180, %v1178
      %v1241 = vpack.c.b16 %v1181, %v1179
      %v1242 = vpack.c.b16 %v1184, %v1182
      %v1243 = vpack.c.b16 %v1185, %v1183
      %v1244 = vpack.c.b16 %v1188, %v1186
      %v1245 = vpack.c.b16 %v1189, %v1187
      %v1246 = vpack.c.b16 %v1192, %v1190
      %v1247 = vpack.c.b16 %v1193, %v1191
      %v1248 = vpack.c.b16 %v1196, %v1194
      %v1249 = vpack.c.b16 %v1197, %v1195
      %v1250 = vpack.c.b16 %v1200, %v1198
      %v1251 = vpack.c.b16 %v1201, %v1199
      %v1252 = vpack.c.b16 %v1204, %v1202
      %v1253 = vpack.c.b16 %v1205, %v1203
      %v1254 = vpack.c.b16 %v1208, %v1206
      %v1255 = vpack.c.b16 %v1209, %v1207
      %v1256 = vpack.c.b16 %v1212, %v1210
      %v1257 = vpack.c.b16 %v1213, %v1211
      %v1258 = vpack.c.b16 %v1216, %v1214
      %v1259 = vpack.c.b16 %v1217, %v1215
      %v1260 = vpack.c.b16 %v1220, %v1218
      %v1261 = vpack.c.b16 %v1221, %v1219
      %v1262 = vpack.c.b16 %v1224, %v1222
      %v1263 = vpack.c.b16 %v1225, %v1223
      %v1264 = vpack.c.b16 %v1228, %v1226
      %v1265 = vpack.c.b16 %v1229, %v1227
      %v1266 = vpack.c.b16 %v1232, %v1230
      %v1267 = vpack.c.b16 %v1233, %v1231
      %v1268 = vpack.c.b16 %v1236, %v1234
      %v1269 = vpack.c.b16 %v1237, %v1235
      %1302 = vmatprep.subr.bf16.mxu0 %v1239
      %1303 = vmatpush1.bf16.msra.mxu0 %v1238
      %1304 = vmatprep.subr.bf16.mxu0 %v1241
      %1305 = vmatpush1.bf16.msra.mxu0 %v1240
      %1306 = vmatprep.subr.bf16.mxu0 %v1243
      %1307 = vmatpush1.bf16.msra.mxu0 %v1242
      %1308 = vmatprep.subr.bf16.mxu0 %v1245
      %1309 = vmatpush1.bf16.msra.mxu0 %v1244
      %1310 = vmatprep.subr.bf16.mxu0 %v1247
      %1311 = vmatpush1.bf16.msra.mxu0 %v1246
      %1312 = vmatprep.subr.bf16.mxu0 %v1249
      %1313 = vmatpush1.bf16.msra.mxu0 %v1248
      %1314 = vmatprep.subr.bf16.mxu0 %v1251
      %1315 = vmatpush1.bf16.msra.mxu0 %v1250
      %1316 = vmatprep.subr.bf16.mxu0 %v1253
      %1317 = vmatpush1.bf16.msra.mxu0 %v1252
      %1318 = vmatprep.subr.bf16.mxu0 %v1255
      %1319 = vmatpush1.bf16.msra.mxu0 %v1254
      %1320 = vmatprep.subr.bf16.mxu0 %v1257
      %1321 = vmatpush1.bf16.msra.mxu0 %v1256
      %1322 = vmatprep.subr.bf16.mxu0 %v1259
      %1323 = vmatpush1.bf16.msra.mxu0 %v1258
      %1324 = vmatprep.subr.bf16.mxu0 %v1261
      %1325 = vmatpush1.bf16.msra.mxu0 %v1260
      %1326 = vmatprep.subr.bf16.mxu0 %v1263
      %1327 = vmatpush1.bf16.msra.mxu0 %v1262
      %1328 = vmatprep.subr.bf16.mxu0 %v1265
      %1329 = vmatpush1.bf16.msra.mxu0 %v1264
      %1330 = vmatprep.subr.bf16.mxu0 %v1267
      %1331 = vmatpush1.bf16.msra.mxu0 %v1266
      %1332 = vmatprep.subr.bf16.mxu0 %v1269
      %1333 = vmatpush1.bf16.msra.mxu0 %v1268
      %1334 = vmatprep.mubr.bf16.mxu0 %v1109
      %1335 = vmatmul.mubr.bf16.gmra.mrb[0].mxu0 %v1108
      %v1336 = vpop.f32.mrb[0].mxu0
      %v1337 = vadd.f32 0.0, %v1336
      %v1338 = vpop.f32.mrb[0].mxu0
      %v1339 = vadd.f32 0.0, %v1338
      %v1340 = vpop.f32.mrb[0].mxu0
      %v1341 = vpop.f32.mrb[0].mxu0
      %1342 = vdwg.mxu0
      %v1343 = vpack.c.bf16 %v1337, %v1337
      %v1344 = vpack.c.bf16 %v1339, %v1339
      %1345 = vmatprep.subr.bf16.mxu0 %v583
      %1346 = vmatpush1.bf16.xpose.msra.mxu0 %v582
      %1347 = vmatprep.subr.bf16.mxu0 0
      %1348 = vmatpush1.bf16.xpose.msra.mxu0 0
      %1349 = vmatprep.subr.bf16.mxu0 0
      %1350 = vmatpush1.bf16.xpose.msra.mxu0 0
      %1351 = vmatprep.subr.bf16.mxu0 0
      %1352 = vmatpush1.bf16.xpose.msra.mxu0 0
      %1353 = vmatprep.subr.bf16.mxu0 0
      %1354 = vmatpush1.bf16.xpose.msra.mxu0 0
      %1355 = vmatprep.subr.bf16.mxu0 0
      %1356 = vmatpush1.bf16.xpose.msra.mxu0 0
      %1357 = vmatprep.subr.bf16.mxu0 0
      %1358 = vmatpush1.bf16.xpose.msra.mxu0 0
      %1359 = vmatprep.subr.bf16.mxu0 0
      %1360 = vmatpush1.bf16.xpose.msra.mxu0 0
      %1361 = vmatprep.subr.bf16.mxu0 0
      %1362 = vmatpush1.bf16.xpose.msra.mxu0 0
      %1363 = vmatprep.subr.bf16.mxu0 0
      %1364 = vmatpush1.bf16.xpose.msra.mxu0 0
      %1365 = vmatprep.subr.bf16.mxu0 0
      %1366 = vmatpush1.bf16.xpose.msra.mxu0 0
      %1367 = vmatprep.subr.bf16.mxu0 0
      %1368 = vmatpush1.bf16.xpose.msra.mxu0 0
      %1369 = vmatprep.subr.bf16.mxu0 0
      %1370 = vmatpush1.bf16.xpose.msra.mxu0 0
      %1371 = vmatprep.subr.bf16.mxu0 0
      %1372 = vmatpush1.bf16.xpose.msra.mxu0 0
      %1373 = vmatprep.subr.bf16.mxu0 0
      %1374 = vmatpush1.bf16.xpose.msra.mxu0 0
      %1375 = vmatprep.subr.bf16.mxu0 0
      %1376 = vmatpush1.bf16.xpose.msra.mxu0 0
      %1377 = vmatprep.mubr.bf16.mxu0 %v1344
      %1378 = vmatmul.mubr.bf16.gmra.mrb[0].mxu0 %v1343
      %v1379 = vpop.f32.mrb[0].mxu0
      %v1380 = vadd.f32 0.0, %v1379
      %v1381 = vpop.f32.mrb[0].mxu0
      %v1382 = vpop.f32.mrb[0].mxu0
      %v1383 = vpop.f32.mrb[0].mxu0
      %1384 = vdwg.mxu0
      %v1385 = vxor.u32 %v1380, 2147483648
      %v1386 = vmul.f32 %v1385, 1.442695
      %v1387 = vpow.pop %v1386
      %v1388 = vadd.f32 %v1387, 1.0
      %v1389 = vrcp.pop %v1388
      %v1390 = vmul.f32 1.0, %v1389
      %v1391 = vpack.c.bf16 %v1390, %v1390
      %vm1392 = vcmask 122880
      %vm1393 = vsmask.f32 256
      %vm1394 = vmand %vm1392, %vm1393
      %v1395 = vld [vmem:[%s267] sm:$0x1]
      %v1396 = vsel %vm1394, %v1391, %v1395
      %1397 = vst [vmem:[%s267] sm:$0x1] %v1396
      %p1398 = scmp.lt.s32.totalorder %s17, 1
      %s1399 = scalar_select %p1398, %s17, 1
      %s1400 = scalar_lea.vmem %s6, %s1399
      // Predicated region
      $region45: #{bbox_sam_forward.3} parent=43 // pred_check
        %p1401 = pneg %p171
      $region46: #{bbox_sam_forward.3} parent=43 // pred_check_branch
        %1403 = sbr.rel (%p1401) target = $region48
      $region47: #{bbox_sam_forward.3} parent=43 // pred_region
        _
      $region48: #{bbox_sam_forward.3} parent=43 // pred_fallthru
        _
    $region44: #{bbox_sam_forward.3} parent=5 // pred_fallthru
      _
    %p1404 = scmp.le.s32.totalorder 2, %s12
    // Predicated region
    $region49: #{bbox_sam_forward.3} parent=5 // pred_check
      %p1405 = pneg %p1404
    $region50: #{bbox_sam_forward.3} parent=5 // pred_check_branch
      %1407 = sbr.rel (%p1405) target = $region52
    $region51: #{bbox_sam_forward.3} parent=5 // pred_region
      %s1408 = ssub.s32 %s12, 2
      // Predicated region
      $region53: #{bbox_sam_forward.3} parent=51 // pred_check
        %p1409 = pneg %p177
      $region54: #{bbox_sam_forward.3} parent=51 // pred_check_branch
        %1411 = sbr.rel (%p1409) target = $region56
      $region55: #{bbox_sam_forward.3} parent=51 // pred_region
        %p1412 = scmp.lt.s32.totalorder %s18, 1
        %s1413 = scalar_select %p1412, %s18, 1
        %s1414 = scalar_lea.vmem %s6, %s1413
      $region56: #{bbox_sam_forward.3} parent=51 // pred_fallthru
        _
    $region52: #{bbox_sam_forward.3} parent=5 // pred_fallthru
      _
  $region6: #{bbox_sam_forward.3} parent=0 // loop_footer
    %s16 = sadd.s32 1, %s12
  $region7: #{bbox_sam_forward.3} parent=0 // loop_footer_branch
    %11 = sbr.rel target = $region3
  $region8: #{bbox_sam_forward.3} parent=0 // loop_exit
    _

</llo_original>
